<compile_context>
chip_gen: v7x
topology: tpu7x:2x2x1
jax: 0.10.0
libtpu: 0.0.40
codegen_flags: <defaults>
</compile_context>

<pallas_src>
import jax
import jax.numpy as jnp
from jax.experimental import pallas as pl
from jax.experimental.pallas import tpu as pltpu


def _se_conv1x1_kernel(x_ref, g_ref, w_ref, o_ref):
    # x_ref: (Cin, HW) f32   g_ref: (1, Cin) f32   w_ref: (Cout, Cin) bf16
    # o_ref: (Cout, HW) f32
    gate = jax.nn.sigmoid(g_ref[...])                      # (1, Cin), lane-dense EUP
    # Fold gate into the weight: broadcast along W's lane axis (Cin last).
    ws = (w_ref[...] * gate).astype(jnp.bfloat16)          # (Cout, Cin) bf16
    xb = x_ref[...].astype(jnp.bfloat16)                   # straight cast, no f32 mul on x
    o_ref[...] = jnp.dot(
        ws, xb,                                            # (Cout,Cin) @ (Cin,HW)
        preferred_element_type=jnp.float32,
    ).astype(o_ref.dtype)


def prepare_conv_weight(w_oihw):
    """One-time weight prep: (Cout, Cin, 1, 1) -> (Cout, Cin) bf16.

    Call this once outside the hot path (or let it constant-fold under jit
    with a baked-in weight); do NOT re-run it per forward call.
    """
    return w_oihw[:, :, 0, 0].astype(jnp.bfloat16)


def sigmoid_mul_conv1x1(x_nchw, gate_nchw, w_mat):
    """x_nchw: (N, Cin, H, W), gate_nchw: (N, Cin, 1, 1), w_mat: (Cout, Cin) bf16."""
    N, Cin, H, W = x_nchw.shape
    Cout = w_mat.shape[0]
    HW = H * W

    # Glue: free reshapes only (channel-major is NCHW-native).
    x_cm = x_nchw.reshape(N, Cin, HW)                      # (N, Cin, HW)
    g_cm = gate_nchw.reshape(N, 1, Cin)                    # (N, 1, Cin)  lane-dense gate

    out_dtype = x_nchw.dtype
    cost = pl.CostEstimate(
        flops=2 * N * HW * Cin * Cout,
        transcendentals=N * Cin,
        bytes_accessed=(
            N * Cin * HW * jnp.dtype(x_nchw.dtype).itemsize     # activations in
            + N * Cin * jnp.dtype(gate_nchw.dtype).itemsize     # gate in
            + Cout * Cin * jnp.dtype(w_mat.dtype).itemsize      # bf16 weight in
            + N * Cout * HW * jnp.dtype(out_dtype).itemsize     # out
        ),
    )

    if N == 1:
        # No grid: whole problem (<2 MB) fits comfortably in VMEM on every
        # generation; skip pipelining machinery and weight double-buffering.
        vmem = pl.BlockSpec(memory_space=pltpu.MemorySpace.VMEM)
        out_cm = pl.pallas_call(
            _se_conv1x1_kernel,
            out_shape=jax.ShapeDtypeStruct((Cout, HW), out_dtype),
            in_specs=[vmem, vmem, vmem],
            out_specs=vmem,
            cost_estimate=cost,
        )(x_cm[0], g_cm[0], w_mat)
        out_cm = out_cm[None]                              # (1, Cout, HW)
    else:
        out_cm = pl.pallas_call(
            _se_conv1x1_kernel,
            out_shape=jax.ShapeDtypeStruct((N, Cout, HW), out_dtype),
            grid_spec=pltpu.PrefetchScalarGridSpec(
                num_scalar_prefetch=0,
                grid=(N,),
                in_specs=[
                    pl.BlockSpec((None, Cin, HW), lambda n: (n, 0, 0)),  # per-batch x
                    pl.BlockSpec((None, 1, Cin), lambda n: (n, 0, 0)),   # per-batch gate
                    pl.BlockSpec((Cout, Cin), lambda n: (0, 0)),         # resident weight
                ],
                out_specs=pl.BlockSpec((None, Cout, HW), lambda n: (n, 0, 0)),
            ),
            compiler_params=pltpu.CompilerParams(
                dimension_semantics=("parallel",),
            ),
            cost_estimate=cost,
        )(x_cm, g_cm, w_mat)

    # Glue: free reshape back to NCHW.
    return out_cm.reshape(N, Cout, H, W)


if __name__ == "__main__":
    # Shapes implied by the module: x270 (1, 816, 7, 7), x274 (1, 816, 1, 1),
    # conv weight (232, 816, 1, 1).  Small enough to use directly.
    N, Cin, H, W, Cout = 1, 816, 7, 7, 232

    key = jax.random.PRNGKey(0)
    k0, k1, k2 = jax.random.split(key, 3)
    x270 = jax.random.normal(k0, (N, Cin, H, W), dtype=jnp.float32)
    x274 = jax.random.normal(k1, (N, Cin, 1, 1), dtype=jnp.float32)
    # Deterministic Kaiming-style init for the 1x1 conv weight.
    w = jax.random.normal(k2, (Cout, Cin, 1, 1), dtype=jnp.float32) * (2.0 / Cin) ** 0.5

    # Weight prep happens once, outside the per-call path.
    w_mat = jax.block_until_ready(prepare_conv_weight(w))

    fwd = jax.jit(sigmoid_mul_conv1x1)
    out = fwd(x270, x274, w_mat)
    out = jax.block_until_ready(out)

    # Pure-JAX f32 reference (sigmoid-mul + 1x1 conv as einsum).  Tolerance is
    # loose because the matmul operands (gated weight, activation) are bf16;
    # accumulation is still f32.
    ref = jnp.einsum(
        "nchw,oc->nohw",
        x270 * jax.nn.sigmoid(x274),
        w[:, :, 0, 0],
    )
    assert out.shape == (N, Cout, H, W), out.shape
    max_err = float(jnp.max(jnp.abs(out - ref)))
    assert jnp.allclose(out, ref, atol=5e-2, rtol=5e-2), max_err

    print("KERNEL_OK")
</pallas_src>

<mosaic_0001>
module attributes {stable_mosaic.version = 11 : i64} {
  func.func @_se_conv1x1_kernel(%arg0: memref<816x49xf32, #tpu.memory_space<vmem>>, %arg1: memref<1x816xf32, #tpu.memory_space<vmem>>, %arg2: memref<232x816xbf16, #tpu.memory_space<vmem>>, %arg3: memref<232x49xf32, #tpu.memory_space<vmem>>) attributes {dimension_semantics = [], scalar_prefetch = 0 : i64, scratch_operands = 0 : i64, tpu.core_type = #tpu.core_type<tc>} {
    %c0 = arith.constant 0 : index
    %c0_0 = arith.constant 0 : index
    %0 = vector.load %arg1[%c0, %c0_0] : memref<1x816xf32, #tpu.memory_space<vmem>>, vector<1x816xf32>
    %1 = arith.negf %0 : vector<1x816xf32>
    %2 = math.exp %1 : vector<1x816xf32>
    %cst = arith.constant 1.000000e+00 : f32
    %3 = vector.broadcast %cst : f32 to vector<1x816xf32>
    %4 = arith.addf %3, %2 : vector<1x816xf32>
    %5 = arith.divf %3, %4 : vector<1x816xf32>
    %c0_1 = arith.constant 0 : index
    %c0_2 = arith.constant 0 : index
    %6 = vector.load %arg2[%c0_1, %c0_2] : memref<232x816xbf16, #tpu.memory_space<vmem>>, vector<232x816xbf16>
    %7 = arith.extf %6 : vector<232x816xbf16> to vector<232x816xf32>
    %8 = vector.broadcast %5 : vector<1x816xf32> to vector<232x816xf32>
    %9 = arith.mulf %7, %8 : vector<232x816xf32>
    %10 = arith.truncf %9 : vector<232x816xf32> to vector<232x816xbf16>
    %c0_3 = arith.constant 0 : index
    %c0_4 = arith.constant 0 : index
    %11 = vector.load %arg0[%c0_3, %c0_4] : memref<816x49xf32, #tpu.memory_space<vmem>>, vector<816x49xf32>
    %12 = arith.truncf %11 : vector<816x49xf32> to vector<816x49xbf16>
    %cst_5 = arith.constant dense<0.000000e+00> : vector<232x49xf32>
    %13 = tpu.matmul %10, %12, %cst_5 {dimension_numbers = #tpu.dot_dimension_numbers<[1], [0], [0], [1], [0, 0, 1, 1], [], []>} : vector<232x816xbf16>, vector<816x49xbf16>, vector<232x49xf32> -> vector<232x49xf32>
    %c0_6 = arith.constant 0 : index
    %c0_7 = arith.constant 0 : index
    %14 = vector.load %arg3[%c0_6, %c0_7] : memref<232x49xf32, #tpu.memory_space<vmem>>, vector<232x49xf32>
    tpu.vector_store %arg3[%c0_6, %c0_7], %13 {strides = array<i32>} : memref<232x49xf32, #tpu.memory_space<vmem>>, vector<232x49xf32>,
    return
  }
}

</mosaic_0001>

<llo_original>
// kernel: sigmoid_mul_conv1x1.1
$region0: #{sigmoid_mul_conv1x1.1}
  #allocation0 [shape = 'u32[]', space=smem, size = 0x4, offset = 0x4, fixed_abs, tag = 'smem constant byte address 0x4 - core index']
  #allocation1 [shape = 'u32[144,128]{1,0:T(1,128)}', space=vmem, size = 0x12000, scoped, tag = 'internal scratch']
  %s0 = inlined_call_operand.vmem [shape: f32[816,49], index: 0, kind: input, shape index: {}]
  %s1 = inlined_call_operand.vmem [shape: f32[1,816], index: 1, kind: input, shape index: {}]
  %s2 = inlined_call_operand.vmem [shape: bf16[232,816], index: 2, kind: input, shape index: {}]
  %s3 = inlined_call_operand.vmem [shape: f32[232,49], index: 3, kind: output, shape index: {}]
  %s4 = sld [smem:[#allocation0]]
  $region22: #{sigmoid_mul_conv1x1.1} parent=0
    _
  %s6 = ssub.s32 1, %s4
  %s7 = scalar_select 0, %s6, %s4
  // Predicated region
  $region2: #{sigmoid_mul_conv1x1.1} parent=0 // pred_check
    _
  $region3: #{sigmoid_mul_conv1x1.1} parent=0 // pred_check_branch
    %9 = sbr.rel (0) target = $region5
  $region4: #{sigmoid_mul_conv1x1.1} parent=0 // pred_region
    _
  $region5: #{sigmoid_mul_conv1x1.1} parent=0 // pred_fallthru
    _
  // Predicated region
  $region6: #{sigmoid_mul_conv1x1.1} parent=0 // pred_check
    _
  $region7: #{sigmoid_mul_conv1x1.1} parent=0 // pred_check_branch
    %11 = sbr.rel (0) target = $region9
  $region8: #{sigmoid_mul_conv1x1.1} parent=0 // pred_region
    _
  $region9: #{sigmoid_mul_conv1x1.1} parent=0 // pred_fallthru
    _
  // Predicated region
  $region10: #{sigmoid_mul_conv1x1.1} parent=0 // pred_check
    _
  $region11: #{sigmoid_mul_conv1x1.1} parent=0 // pred_check_branch
    %13 = sbr.rel (0) target = $region13
  $region12: #{sigmoid_mul_conv1x1.1} parent=0 // pred_region
    _
  $region13: #{sigmoid_mul_conv1x1.1} parent=0 // pred_fallthru
    _
  %v15 = vld [vmem:[%s1] sm:$0x7f]
  %v16 = vxor.u32 %v15, 2147483648
  %v17 = vmul.f32 %v16, 1.442695
  %v18 = vpow.pop %v17
  %v19 = vadd.f32 %v18, 1.0
  %v20 = vrcp.pop %v19
  %v21 = vmul.f32 1.0, %v20
  %v22 = vld [vmem:[%s2] sm:$0xff]
  %v23 = vld [vmem:[%s2 + $0x8] sm:$0xff]
  %v24 = vld [vmem:[%s2 + $0x10] sm:$0xff]
  %v25 = vld [vmem:[%s2 + $0x18] sm:$0xf]
  %v26 = vld [vmem:[%s2 + $0x1c] sm:$0xff]
  %v27 = vld [vmem:[%s2 + $0x24] sm:$0xff]
  %v28 = vld [vmem:[%s2 + $0x2c] sm:$0xff]
  %v29 = vld [vmem:[%s2 + $0x34] sm:$0xf]
  %v30 = vld [vmem:[%s2 + $0x38] sm:$0xff]
  %v31 = vld [vmem:[%s2 + $0x40] sm:$0xff]
  %v32 = vld [vmem:[%s2 + $0x48] sm:$0xff]
  %v33 = vld [vmem:[%s2 + $0x50] sm:$0xf]
  %v34 = vld [vmem:[%s2 + $0x54] sm:$0xff]
  %v35 = vld [vmem:[%s2 + $0x5c] sm:$0xff]
  %v36 = vld [vmem:[%s2 + $0x64] sm:$0xff]
  %v37 = vld [vmem:[%s2 + $0x6c] sm:$0xf]
  %v38 = vld [vmem:[%s2 + $0x70] sm:$0xff]
  %v39 = vld [vmem:[%s2 + $0x78] sm:$0xff]
  %v40 = vld [vmem:[%s2 + $0x80] sm:$0xff]
  %v41 = vld [vmem:[%s2 + $0x88] sm:$0xf]
  %v42 = vld [vmem:[%s2 + $0x8c] sm:$0xff]
  %v43 = vld [vmem:[%s2 + $0x94] sm:$0xff]
  %v44 = vld [vmem:[%s2 + $0x9c] sm:$0xff]
  %v45 = vld [vmem:[%s2 + $0xa4] sm:$0xf]
  %v46 = vld [vmem:[%s2 + $0xa8] sm:$0xff]
  %v47 = vld [vmem:[%s2 + $0xb0] sm:$0xff]
  %v48 = vld [vmem:[%s2 + $0xb8] sm:$0xff]
  %v49 = vld [vmem:[%s2 + $0xc0] sm:$0xf]
  %v50 = vld [vmem:[%s2 + $0xc4] sm:$0xff]
  %v51 = vld [vmem:[%s2 + $0xcc] sm:$0xff]
  %v52 = vld [vmem:[%s2 + $0xd4] sm:$0xff]
  %v53 = vld [vmem:[%s2 + $0xdc] sm:$0xf]
  %v54 = vld [vmem:[%s2 + $0xe0] sm:$0xff]
  %v55 = vld [vmem:[%s2 + $0xe8] sm:$0xff]
  %v56 = vld [vmem:[%s2 + $0xf0] sm:$0xff]
  %v57 = vld [vmem:[%s2 + $0xf8] sm:$0xf]
  %v58 = vld [vmem:[%s2 + $0xfc] sm:$0xff]
  %v59 = vld [vmem:[%s2 + $0x104] sm:$0xff]
  %v60 = vld [vmem:[%s2 + $0x10c] sm:$0xff]
  %v61 = vld [vmem:[%s2 + $0x114] sm:$0xf]
  %v62 = vld [vmem:[%s2 + $0x118] sm:$0xff]
  %v63 = vld [vmem:[%s2 + $0x120] sm:$0xff]
  %v64 = vld [vmem:[%s2 + $0x128] sm:$0xff]
  %v65 = vld [vmem:[%s2 + $0x130] sm:$0xf]
  %v66 = vld [vmem:[%s2 + $0x134] sm:$0xff]
  %v67 = vld [vmem:[%s2 + $0x13c] sm:$0xff]
  %v68 = vld [vmem:[%s2 + $0x144] sm:$0xff]
  %v69 = vld [vmem:[%s2 + $0x14c] sm:$0xf]
  %v70 = vld [vmem:[%s2 + $0x150] sm:$0xff]
  %v71 = vld [vmem:[%s2 + $0x158] sm:$0xff]
  %v72 = vld [vmem:[%s2 + $0x160] sm:$0xff]
  %v73 = vld [vmem:[%s2 + $0x168] sm:$0xf]
  %v74 = vld [vmem:[%s2 + $0x16c] sm:$0xff]
  %v75 = vld [vmem:[%s2 + $0x174] sm:$0xff]
  %v76 = vld [vmem:[%s2 + $0x17c] sm:$0xff]
  %v77 = vld [vmem:[%s2 + $0x184] sm:$0xf]
  %v78 = vld [vmem:[%s2 + $0x188] sm:$0xff]
  %v79 = vld [vmem:[%s2 + $0x190] sm:$0xff]
  %v80 = vld [vmem:[%s2 + $0x198] sm:$0xff]
  %v81 = vld [vmem:[%s2 + $0x1a0] sm:$0xf]
  %v82 = vld [vmem:[%s2 + $0x1a4] sm:$0xff]
  %v83 = vld [vmem:[%s2 + $0x1ac] sm:$0xff]
  %v84 = vld [vmem:[%s2 + $0x1b4] sm:$0xff]
  %v85 = vld [vmem:[%s2 + $0x1bc] sm:$0xf]
  %v86 = vld [vmem:[%s2 + $0x1c0] sm:$0xff]
  %v87 = vld [vmem:[%s2 + $0x1c8] sm:$0xff]
  %v88 = vld [vmem:[%s2 + $0x1d0] sm:$0xff]
  %v89 = vld [vmem:[%s2 + $0x1d8] sm:$0xf]
  %v90 = vld [vmem:[%s2 + $0x1dc] sm:$0xff]
  %v91 = vld [vmem:[%s2 + $0x1e4] sm:$0xff]
  %v92 = vld [vmem:[%s2 + $0x1ec] sm:$0xff]
  %v93 = vld [vmem:[%s2 + $0x1f4] sm:$0xf]
  %v94 = vld [vmem:[%s2 + $0x1f8] sm:$0xff]
  %v95 = vld [vmem:[%s2 + $0x200] sm:$0xff]
  %v96 = vld [vmem:[%s2 + $0x208] sm:$0xff]
  %v97 = vld [vmem:[%s2 + $0x210] sm:$0xf]
  %v98 = vld [vmem:[%s2 + $0x214] sm:$0xff]
  %v99 = vld [vmem:[%s2 + $0x21c] sm:$0xff]
  %v100 = vld [vmem:[%s2 + $0x224] sm:$0xff]
  %v101 = vld [vmem:[%s2 + $0x22c] sm:$0xf]
  %v102 = vld [vmem:[%s2 + $0x230] sm:$0xff]
  %v103 = vld [vmem:[%s2 + $0x238] sm:$0xff]
  %v104 = vld [vmem:[%s2 + $0x240] sm:$0xff]
  %v105 = vld [vmem:[%s2 + $0x248] sm:$0xf]
  %v106 = vld [vmem:[%s2 + $0x24c] sm:$0xff]
  %v107 = vld [vmem:[%s2 + $0x254] sm:$0xff]
  %v108 = vld [vmem:[%s2 + $0x25c] sm:$0xff]
  %v109 = vld [vmem:[%s2 + $0x264] sm:$0xf]
  %v110 = vld [vmem:[%s2 + $0x268] sm:$0xff]
  %v111 = vld [vmem:[%s2 + $0x270] sm:$0xff]
  %v112 = vld [vmem:[%s2 + $0x278] sm:$0xff]
  %v113 = vld [vmem:[%s2 + $0x280] sm:$0xf]
  %v114 = vld [vmem:[%s2 + $0x284] sm:$0xff]
  %v115 = vld [vmem:[%s2 + $0x28c] sm:$0xff]
  %v116 = vld [vmem:[%s2 + $0x294] sm:$0xff]
  %v117 = vld [vmem:[%s2 + $0x29c] sm:$0xf]
  %v118 = vld [vmem:[%s2 + $0x2a0] sm:$0xff]
  %v119 = vld [vmem:[%s2 + $0x2a8] sm:$0xff]
  %v120 = vld [vmem:[%s2 + $0x2b0] sm:$0xff]
  %v121 = vld [vmem:[%s2 + $0x2b8] sm:$0xf]
  %v122 = vld [vmem:[%s2 + $0x2bc] sm:$0xff]
  %v123 = vld [vmem:[%s2 + $0x2c4] sm:$0xff]
  %v124 = vld [vmem:[%s2 + $0x2cc] sm:$0xff]
  %v125 = vld [vmem:[%s2 + $0x2d4] sm:$0xf]
  %v126 = vld [vmem:[%s2 + $0x2d8] sm:$0xff]
  %v127 = vld [vmem:[%s2 + $0x2e0] sm:$0xff]
  %v128 = vld [vmem:[%s2 + $0x2e8] sm:$0xff]
  %v129 = vld [vmem:[%s2 + $0x2f0] sm:$0xf]
  %v130 = vld [vmem:[%s2 + $0x2f4] sm:$0xff]
  %v131 = vld [vmem:[%s2 + $0x2fc] sm:$0xff]
  %v132 = vld [vmem:[%s2 + $0x304] sm:$0xff]
  %v133 = vld [vmem:[%s2 + $0x30c] sm:$0xf]
  %v134 = vld [vmem:[%s2 + $0x310] sm:$0xff]
  %v135 = vld [vmem:[%s2 + $0x318] sm:$0xff]
  %v136 = vld [vmem:[%s2 + $0x320] sm:$0xff]
  %v137 = vld [vmem:[%s2 + $0x328] sm:$0xf]
  %v138 = vunpack.c.l.bf16 %v22
  %v139 = vunpack.c.h.bf16 %v22
  %v140 = vunpack.c.l.bf16 %v23
  %v141 = vunpack.c.h.bf16 %v23
  %v142 = vunpack.c.l.bf16 %v24
  %v143 = vunpack.c.h.bf16 %v24
  %v144 = vunpack.c.l.bf16 %v25
  %v145 = vunpack.c.l.bf16 %v26
  %v146 = vunpack.c.h.bf16 %v26
  %v147 = vunpack.c.l.bf16 %v27
  %v148 = vunpack.c.h.bf16 %v27
  %v149 = vunpack.c.l.bf16 %v28
  %v150 = vunpack.c.h.bf16 %v28
  %v151 = vunpack.c.l.bf16 %v29
  %v152 = vunpack.c.l.bf16 %v30
  %v153 = vunpack.c.h.bf16 %v30
  %v154 = vunpack.c.l.bf16 %v31
  %v155 = vunpack.c.h.bf16 %v31
  %v156 = vunpack.c.l.bf16 %v32
  %v157 = vunpack.c.h.bf16 %v32
  %v158 = vunpack.c.l.bf16 %v33
  %v159 = vunpack.c.l.bf16 %v34
  %v160 = vunpack.c.h.bf16 %v34
  %v161 = vunpack.c.l.bf16 %v35
  %v162 = vunpack.c.h.bf16 %v35
  %v163 = vunpack.c.l.bf16 %v36
  %v164 = vunpack.c.h.bf16 %v36
  %v165 = vunpack.c.l.bf16 %v37
  %v166 = vunpack.c.l.bf16 %v38
  %v167 = vunpack.c.h.bf16 %v38
  %v168 = vunpack.c.l.bf16 %v39
  %v169 = vunpack.c.h.bf16 %v39
  %v170 = vunpack.c.l.bf16 %v40
  %v171 = vunpack.c.h.bf16 %v40
  %v172 = vunpack.c.l.bf16 %v41
  %v173 = vunpack.c.l.bf16 %v42
  %v174 = vunpack.c.h.bf16 %v42
  %v175 = vunpack.c.l.bf16 %v43
  %v176 = vunpack.c.h.bf16 %v43
  %v177 = vunpack.c.l.bf16 %v44
  %v178 = vunpack.c.h.bf16 %v44
  %v179 = vunpack.c.l.bf16 %v45
  %v180 = vunpack.c.l.bf16 %v46
  %v181 = vunpack.c.h.bf16 %v46
  %v182 = vunpack.c.l.bf16 %v47
  %v183 = vunpack.c.h.bf16 %v47
  %v184 = vunpack.c.l.bf16 %v48
  %v185 = vunpack.c.h.bf16 %v48
  %v186 = vunpack.c.l.bf16 %v49
  %v187 = vunpack.c.l.bf16 %v50
  %v188 = vunpack.c.h.bf16 %v50
  %v189 = vunpack.c.l.bf16 %v51
  %v190 = vunpack.c.h.bf16 %v51
  %v191 = vunpack.c.l.bf16 %v52
  %v192 = vunpack.c.h.bf16 %v52
  %v193 = vunpack.c.l.bf16 %v53
  %v194 = vunpack.c.l.bf16 %v54
  %v195 = vunpack.c.h.bf16 %v54
  %v196 = vunpack.c.l.bf16 %v55
  %v197 = vunpack.c.h.bf16 %v55
  %v198 = vunpack.c.l.bf16 %v56
  %v199 = vunpack.c.h.bf16 %v56
  %v200 = vunpack.c.l.bf16 %v57
  %v201 = vunpack.c.l.bf16 %v58
  %v202 = vunpack.c.h.bf16 %v58
  %v203 = vunpack.c.l.bf16 %v59
  %v204 = vunpack.c.h.bf16 %v59
  %v205 = vunpack.c.l.bf16 %v60
  %v206 = vunpack.c.h.bf16 %v60
  %v207 = vunpack.c.l.bf16 %v61
  %v208 = vunpack.c.l.bf16 %v62
  %v209 = vunpack.c.h.bf16 %v62
  %v210 = vunpack.c.l.bf16 %v63
  %v211 = vunpack.c.h.bf16 %v63
  %v212 = vunpack.c.l.bf16 %v64
  %v213 = vunpack.c.h.bf16 %v64
  %v214 = vunpack.c.l.bf16 %v65
  %v215 = vunpack.c.l.bf16 %v66
  %v216 = vunpack.c.h.bf16 %v66
  %v217 = vunpack.c.l.bf16 %v67
  %v218 = vunpack.c.h.bf16 %v67
  %v219 = vunpack.c.l.bf16 %v68
  %v220 = vunpack.c.h.bf16 %v68
  %v221 = vunpack.c.l.bf16 %v69
  %v222 = vunpack.c.l.bf16 %v70
  %v223 = vunpack.c.h.bf16 %v70
  %v224 = vunpack.c.l.bf16 %v71
  %v225 = vunpack.c.h.bf16 %v71
  %v226 = vunpack.c.l.bf16 %v72
  %v227 = vunpack.c.h.bf16 %v72
  %v228 = vunpack.c.l.bf16 %v73
  %v229 = vunpack.c.l.bf16 %v74
  %v230 = vunpack.c.h.bf16 %v74
  %v231 = vunpack.c.l.bf16 %v75
  %v232 = vunpack.c.h.bf16 %v75
  %v233 = vunpack.c.l.bf16 %v76
  %v234 = vunpack.c.h.bf16 %v76
  %v235 = vunpack.c.l.bf16 %v77
  %v236 = vunpack.c.l.bf16 %v78
  %v237 = vunpack.c.h.bf16 %v78
  %v238 = vunpack.c.l.bf16 %v79
  %v239 = vunpack.c.h.bf16 %v79
  %v240 = vunpack.c.l.bf16 %v80
  %v241 = vunpack.c.h.bf16 %v80
  %v242 = vunpack.c.l.bf16 %v81
  %v243 = vunpack.c.l.bf16 %v82
  %v244 = vunpack.c.h.bf16 %v82
  %v245 = vunpack.c.l.bf16 %v83
  %v246 = vunpack.c.h.bf16 %v83
  %v247 = vunpack.c.l.bf16 %v84
  %v248 = vunpack.c.h.bf16 %v84
  %v249 = vunpack.c.l.bf16 %v85
  %v250 = vunpack.c.l.bf16 %v86
  %v251 = vunpack.c.h.bf16 %v86
  %v252 = vunpack.c.l.bf16 %v87
  %v253 = vunpack.c.h.bf16 %v87
  %v254 = vunpack.c.l.bf16 %v88
  %v255 = vunpack.c.h.bf16 %v88
  %v256 = vunpack.c.l.bf16 %v89
  %v257 = vunpack.c.l.bf16 %v90
  %v258 = vunpack.c.h.bf16 %v90
  %v259 = vunpack.c.l.bf16 %v91
  %v260 = vunpack.c.h.bf16 %v91
  %v261 = vunpack.c.l.bf16 %v92
  %v262 = vunpack.c.h.bf16 %v92
  %v263 = vunpack.c.l.bf16 %v93
  %v264 = vunpack.c.l.bf16 %v94
  %v265 = vunpack.c.h.bf16 %v94
  %v266 = vunpack.c.l.bf16 %v95
  %v267 = vunpack.c.h.bf16 %v95
  %v268 = vunpack.c.l.bf16 %v96
  %v269 = vunpack.c.h.bf16 %v96
  %v270 = vunpack.c.l.bf16 %v97
  %v271 = vunpack.c.l.bf16 %v98
  %v272 = vunpack.c.h.bf16 %v98
  %v273 = vunpack.c.l.bf16 %v99
  %v274 = vunpack.c.h.bf16 %v99
  %v275 = vunpack.c.l.bf16 %v100
  %v276 = vunpack.c.h.bf16 %v100
  %v277 = vunpack.c.l.bf16 %v101
  %v278 = vunpack.c.l.bf16 %v102
  %v279 = vunpack.c.h.bf16 %v102
  %v280 = vunpack.c.l.bf16 %v103
  %v281 = vunpack.c.h.bf16 %v103
  %v282 = vunpack.c.l.bf16 %v104
  %v283 = vunpack.c.h.bf16 %v104
  %v284 = vunpack.c.l.bf16 %v105
  %v285 = vunpack.c.l.bf16 %v106
  %v286 = vunpack.c.h.bf16 %v106
  %v287 = vunpack.c.l.bf16 %v107
  %v288 = vunpack.c.h.bf16 %v107
  %v289 = vunpack.c.l.bf16 %v108
  %v290 = vunpack.c.h.bf16 %v108
  %v291 = vunpack.c.l.bf16 %v109
  %v292 = vunpack.c.l.bf16 %v110
  %v293 = vunpack.c.h.bf16 %v110
  %v294 = vunpack.c.l.bf16 %v111
  %v295 = vunpack.c.h.bf16 %v111
  %v296 = vunpack.c.l.bf16 %v112
  %v297 = vunpack.c.h.bf16 %v112
  %v298 = vunpack.c.l.bf16 %v113
  %v299 = vunpack.c.l.bf16 %v114
  %v300 = vunpack.c.h.bf16 %v114
  %v301 = vunpack.c.l.bf16 %v115
  %v302 = vunpack.c.h.bf16 %v115
  %v303 = vunpack.c.l.bf16 %v116
  %v304 = vunpack.c.h.bf16 %v116
  %v305 = vunpack.c.l.bf16 %v117
  %v306 = vunpack.c.l.bf16 %v118
  %v307 = vunpack.c.h.bf16 %v118
  %v308 = vunpack.c.l.bf16 %v119
  %v309 = vunpack.c.h.bf16 %v119
  %v310 = vunpack.c.l.bf16 %v120
  %v311 = vunpack.c.h.bf16 %v120
  %v312 = vunpack.c.l.bf16 %v121
  %v313 = vunpack.c.l.bf16 %v122
  %v314 = vunpack.c.h.bf16 %v122
  %v315 = vunpack.c.l.bf16 %v123
  %v316 = vunpack.c.h.bf16 %v123
  %v317 = vunpack.c.l.bf16 %v124
  %v318 = vunpack.c.h.bf16 %v124
  %v319 = vunpack.c.l.bf16 %v125
  %v320 = vunpack.c.l.bf16 %v126
  %v321 = vunpack.c.h.bf16 %v126
  %v322 = vunpack.c.l.bf16 %v127
  %v323 = vunpack.c.h.bf16 %v127
  %v324 = vunpack.c.l.bf16 %v128
  %v325 = vunpack.c.h.bf16 %v128
  %v326 = vunpack.c.l.bf16 %v129
  %v327 = vunpack.c.l.bf16 %v130
  %v328 = vunpack.c.h.bf16 %v130
  %v329 = vunpack.c.l.bf16 %v131
  %v330 = vunpack.c.h.bf16 %v131
  %v331 = vunpack.c.l.bf16 %v132
  %v332 = vunpack.c.h.bf16 %v132
  %v333 = vunpack.c.l.bf16 %v133
  %v334 = vunpack.c.l.bf16 %v134
  %v335 = vunpack.c.h.bf16 %v134
  %v336 = vunpack.c.l.bf16 %v135
  %v337 = vunpack.c.h.bf16 %v135
  %v338 = vunpack.c.l.bf16 %v136
  %v339 = vunpack.c.h.bf16 %v136
  %v340 = vunpack.c.l.bf16 %v137
  %v342 = vlaneseq
  %v343 = vshrl.u32 %v342, 7
  %v344 = vsub.s32 0, %v343
  %v345 = vrot.slane %v21, %v344
  %v346 = vlaneseq
  %v347 = vshrl.u32 %v346, 7
  %v348 = vsub.s32 1, %v347
  %v349 = vrot.slane %v21, %v348
  %v350 = vlaneseq
  %v351 = vshrl.u32 %v350, 7
  %v352 = vsub.s32 2, %v351
  %v353 = vrot.slane %v21, %v352
  %v354 = vlaneseq
  %v355 = vshrl.u32 %v354, 7
  %v356 = vsub.s32 3, %v355
  %v357 = vrot.slane %v21, %v356
  %v358 = vlaneseq
  %v359 = vshrl.u32 %v358, 7
  %v360 = vsub.s32 4, %v359
  %v361 = vrot.slane %v21, %v360
  %v362 = vlaneseq
  %v363 = vshrl.u32 %v362, 7
  %v364 = vsub.s32 5, %v363
  %v365 = vrot.slane %v21, %v364
  %v366 = vlaneseq
  %v367 = vshrl.u32 %v366, 7
  %v368 = vsub.s32 6, %v367
  %v369 = vrot.slane %v21, %v368
  %v377 = vmul.f32 %v138, %v345
  %v378 = vmul.f32 %v139, %v349
  %v379 = vmul.f32 %v140, %v353
  %v380 = vmul.f32 %v141, %v357
  %v381 = vmul.f32 %v142, %v361
  %v382 = vmul.f32 %v143, %v365
  %v383 = vmul.f32 %v144, %v369
  %v384 = vmul.f32 %v145, %v345
  %v385 = vmul.f32 %v146, %v349
  %v386 = vmul.f32 %v147, %v353
  %v387 = vmul.f32 %v148, %v357
  %v388 = vmul.f32 %v149, %v361
  %v389 = vmul.f32 %v150, %v365
  %v390 = vmul.f32 %v151, %v369
  %v391 = vmul.f32 %v152, %v345
  %v392 = vmul.f32 %v153, %v349
  %v393 = vmul.f32 %v154, %v353
  %v394 = vmul.f32 %v155, %v357
  %v395 = vmul.f32 %v156, %v361
  %v396 = vmul.f32 %v157, %v365
  %v397 = vmul.f32 %v158, %v369
  %v398 = vmul.f32 %v159, %v345
  %v399 = vmul.f32 %v160, %v349
  %v400 = vmul.f32 %v161, %v353
  %v401 = vmul.f32 %v162, %v357
  %v402 = vmul.f32 %v163, %v361
  %v403 = vmul.f32 %v164, %v365
  %v404 = vmul.f32 %v165, %v369
  %v405 = vmul.f32 %v166, %v345
  %v406 = vmul.f32 %v167, %v349
  %v407 = vmul.f32 %v168, %v353
  %v408 = vmul.f32 %v169, %v357
  %v409 = vmul.f32 %v170, %v361
  %v410 = vmul.f32 %v171, %v365
  %v411 = vmul.f32 %v172, %v369
  %v412 = vmul.f32 %v173, %v345
  %v413 = vmul.f32 %v174, %v349
  %v414 = vmul.f32 %v175, %v353
  %v415 = vmul.f32 %v176, %v357
  %v416 = vmul.f32 %v177, %v361
  %v417 = vmul.f32 %v178, %v365
  %v418 = vmul.f32 %v179, %v369
  %v419 = vmul.f32 %v180, %v345
  %v420 = vmul.f32 %v181, %v349
  %v421 = vmul.f32 %v182, %v353
  %v422 = vmul.f32 %v183, %v357
  %v423 = vmul.f32 %v184, %v361
  %v424 = vmul.f32 %v185, %v365
  %v425 = vmul.f32 %v186, %v369
  %v426 = vmul.f32 %v187, %v345
  %v427 = vmul.f32 %v188, %v349
  %v428 = vmul.f32 %v189, %v353
  %v429 = vmul.f32 %v190, %v357
  %v430 = vmul.f32 %v191, %v361
  %v431 = vmul.f32 %v192, %v365
  %v432 = vmul.f32 %v193, %v369
  %v433 = vmul.f32 %v194, %v345
  %v434 = vmul.f32 %v195, %v349
  %v435 = vmul.f32 %v196, %v353
  %v436 = vmul.f32 %v197, %v357
  %v437 = vmul.f32 %v198, %v361
  %v438 = vmul.f32 %v199, %v365
  %v439 = vmul.f32 %v200, %v369
  %v440 = vmul.f32 %v201, %v345
  %v441 = vmul.f32 %v202, %v349
  %v442 = vmul.f32 %v203, %v353
  %v443 = vmul.f32 %v204, %v357
  %v444 = vmul.f32 %v205, %v361
  %v445 = vmul.f32 %v206, %v365
  %v446 = vmul.f32 %v207, %v369
  %v447 = vmul.f32 %v208, %v345
  %v448 = vmul.f32 %v209, %v349
  %v449 = vmul.f32 %v210, %v353
  %v450 = vmul.f32 %v211, %v357
  %v451 = vmul.f32 %v212, %v361
  %v452 = vmul.f32 %v213, %v365
  %v453 = vmul.f32 %v214, %v369
  %v454 = vmul.f32 %v215, %v345
  %v455 = vmul.f32 %v216, %v349
  %v456 = vmul.f32 %v217, %v353
  %v457 = vmul.f32 %v218, %v357
  %v458 = vmul.f32 %v219, %v361
  %v459 = vmul.f32 %v220, %v365
  %v460 = vmul.f32 %v221, %v369
  %v461 = vmul.f32 %v222, %v345
  %v462 = vmul.f32 %v223, %v349
  %v463 = vmul.f32 %v224, %v353
  %v464 = vmul.f32 %v225, %v357
  %v465 = vmul.f32 %v226, %v361
  %v466 = vmul.f32 %v227, %v365
  %v467 = vmul.f32 %v228, %v369
  %v468 = vmul.f32 %v229, %v345
  %v469 = vmul.f32 %v230, %v349
  %v470 = vmul.f32 %v231, %v353
  %v471 = vmul.f32 %v232, %v357
  %v472 = vmul.f32 %v233, %v361
  %v473 = vmul.f32 %v234, %v365
  %v474 = vmul.f32 %v235, %v369
  %v475 = vmul.f32 %v236, %v345
  %v476 = vmul.f32 %v237, %v349
  %v477 = vmul.f32 %v238, %v353
  %v478 = vmul.f32 %v239, %v357
  %v479 = vmul.f32 %v240, %v361
  %v480 = vmul.f32 %v241, %v365
  %v481 = vmul.f32 %v242, %v369
  %v482 = vmul.f32 %v243, %v345
  %v483 = vmul.f32 %v244, %v349
  %v484 = vmul.f32 %v245, %v353
  %v485 = vmul.f32 %v246, %v357
  %v486 = vmul.f32 %v247, %v361
  %v487 = vmul.f32 %v248, %v365
  %v488 = vmul.f32 %v249, %v369
  %v489 = vmul.f32 %v250, %v345
  %v490 = vmul.f32 %v251, %v349
  %v491 = vmul.f32 %v252, %v353
  %v492 = vmul.f32 %v253, %v357
  %v493 = vmul.f32 %v254, %v361
  %v494 = vmul.f32 %v255, %v365
  %v495 = vmul.f32 %v256, %v369
  %v496 = vmul.f32 %v257, %v345
  %v497 = vmul.f32 %v258, %v349
  %v498 = vmul.f32 %v259, %v353
  %v499 = vmul.f32 %v260, %v357
  %v500 = vmul.f32 %v261, %v361
  %v501 = vmul.f32 %v262, %v365
  %v502 = vmul.f32 %v263, %v369
  %v503 = vmul.f32 %v264, %v345
  %v504 = vmul.f32 %v265, %v349
  %v505 = vmul.f32 %v266, %v353
  %v506 = vmul.f32 %v267, %v357
  %v507 = vmul.f32 %v268, %v361
  %v508 = vmul.f32 %v269, %v365
  %v509 = vmul.f32 %v270, %v369
  %v510 = vmul.f32 %v271, %v345
  %v511 = vmul.f32 %v272, %v349
  %v512 = vmul.f32 %v273, %v353
  %v513 = vmul.f32 %v274, %v357
  %v514 = vmul.f32 %v275, %v361
  %v515 = vmul.f32 %v276, %v365
  %v516 = vmul.f32 %v277, %v369
  %v517 = vmul.f32 %v278, %v345
  %v518 = vmul.f32 %v279, %v349
  %v519 = vmul.f32 %v280, %v353
  %v520 = vmul.f32 %v281, %v357
  %v521 = vmul.f32 %v282, %v361
  %v522 = vmul.f32 %v283, %v365
  %v523 = vmul.f32 %v284, %v369
  %v524 = vmul.f32 %v285, %v345
  %v525 = vmul.f32 %v286, %v349
  %v526 = vmul.f32 %v287, %v353
  %v527 = vmul.f32 %v288, %v357
  %v528 = vmul.f32 %v289, %v361
  %v529 = vmul.f32 %v290, %v365
  %v530 = vmul.f32 %v291, %v369
  %v531 = vmul.f32 %v292, %v345
  %v532 = vmul.f32 %v293, %v349
  %v533 = vmul.f32 %v294, %v353
  %v534 = vmul.f32 %v295, %v357
  %v535 = vmul.f32 %v296, %v361
  %v536 = vmul.f32 %v297, %v365
  %v537 = vmul.f32 %v298, %v369
  %v538 = vmul.f32 %v299, %v345
  %v539 = vmul.f32 %v300, %v349
  %v540 = vmul.f32 %v301, %v353
  %v541 = vmul.f32 %v302, %v357
  %v542 = vmul.f32 %v303, %v361
  %v543 = vmul.f32 %v304, %v365
  %v544 = vmul.f32 %v305, %v369
  %v545 = vmul.f32 %v306, %v345
  %v546 = vmul.f32 %v307, %v349
  %v547 = vmul.f32 %v308, %v353
  %v548 = vmul.f32 %v309, %v357
  %v549 = vmul.f32 %v310, %v361
  %v550 = vmul.f32 %v311, %v365
  %v551 = vmul.f32 %v312, %v369
  %v552 = vmul.f32 %v313, %v345
  %v553 = vmul.f32 %v314, %v349
  %v554 = vmul.f32 %v315, %v353
  %v555 = vmul.f32 %v316, %v357
  %v556 = vmul.f32 %v317, %v361
  %v557 = vmul.f32 %v318, %v365
  %v558 = vmul.f32 %v319, %v369
  %v559 = vmul.f32 %v320, %v345
  %v560 = vmul.f32 %v321, %v349
  %v561 = vmul.f32 %v322, %v353
  %v562 = vmul.f32 %v323, %v357
  %v563 = vmul.f32 %v324, %v361
  %v564 = vmul.f32 %v325, %v365
  %v565 = vmul.f32 %v326, %v369
  %v566 = vmul.f32 %v327, %v345
  %v567 = vmul.f32 %v328, %v349
  %v568 = vmul.f32 %v329, %v353
  %v569 = vmul.f32 %v330, %v357
  %v570 = vmul.f32 %v331, %v361
  %v571 = vmul.f32 %v332, %v365
  %v572 = vmul.f32 %v333, %v369
  %v573 = vmul.f32 %v334, %v345
  %v574 = vmul.f32 %v335, %v349
  %v575 = vmul.f32 %v336, %v353
  %v576 = vmul.f32 %v337, %v357
  %v577 = vmul.f32 %v338, %v361
  %v578 = vmul.f32 %v339, %v365
  %v579 = vmul.f32 %v340, %v369
  %v580 = vpack.c.bf16 %v384, %v377
  %v581 = vpack.c.bf16 %v385, %v378
  %v582 = vpack.c.bf16 %v386, %v379
  %v583 = vpack.c.bf16 %v387, %v380
  %v584 = vpack.c.bf16 %v388, %v381
  %v585 = vpack.c.bf16 %v389, %v382
  %v586 = vpack.c.bf16 %v390, %v383
  %v587 = vpack.c.bf16 %v398, %v391
  %v588 = vpack.c.bf16 %v399, %v392
  %v589 = vpack.c.bf16 %v400, %v393
  %v590 = vpack.c.bf16 %v401, %v394
  %v591 = vpack.c.bf16 %v402, %v395
  %v592 = vpack.c.bf16 %v403, %v396
  %v593 = vpack.c.bf16 %v404, %v397
  %v594 = vpack.c.bf16 %v412, %v405
  %v595 = vpack.c.bf16 %v413, %v406
  %v596 = vpack.c.bf16 %v414, %v407
  %v597 = vpack.c.bf16 %v415, %v408
  %v598 = vpack.c.bf16 %v416, %v409
  %v599 = vpack.c.bf16 %v417, %v410
  %v600 = vpack.c.bf16 %v418, %v411
  %v601 = vpack.c.bf16 %v426, %v419
  %v602 = vpack.c.bf16 %v427, %v420
  %v603 = vpack.c.bf16 %v428, %v421
  %v604 = vpack.c.bf16 %v429, %v422
  %v605 = vpack.c.bf16 %v430, %v423
  %v606 = vpack.c.bf16 %v431, %v424
  %v607 = vpack.c.bf16 %v432, %v425
  %v608 = vpack.c.bf16 %v440, %v433
  %v609 = vpack.c.bf16 %v441, %v434
  %v610 = vpack.c.bf16 %v442, %v435
  %v611 = vpack.c.bf16 %v443, %v436
  %v612 = vpack.c.bf16 %v444, %v437
  %v613 = vpack.c.bf16 %v445, %v438
  %v614 = vpack.c.bf16 %v446, %v439
  %v615 = vpack.c.bf16 %v454, %v447
  %v616 = vpack.c.bf16 %v455, %v448
  %v617 = vpack.c.bf16 %v456, %v449
  %v618 = vpack.c.bf16 %v457, %v450
  %v619 = vpack.c.bf16 %v458, %v451
  %v620 = vpack.c.bf16 %v459, %v452
  %v621 = vpack.c.bf16 %v460, %v453
  %v622 = vpack.c.bf16 %v468, %v461
  %v623 = vpack.c.bf16 %v469, %v462
  %v624 = vpack.c.bf16 %v470, %v463
  %v625 = vpack.c.bf16 %v471, %v464
  %v626 = vpack.c.bf16 %v472, %v465
  %v627 = vpack.c.bf16 %v473, %v466
  %v628 = vpack.c.bf16 %v474, %v467
  %v629 = vpack.c.bf16 %v482, %v475
  %v630 = vpack.c.bf16 %v483, %v476
  %v631 = vpack.c.bf16 %v484, %v477
  %v632 = vpack.c.bf16 %v485, %v478
  %v633 = vpack.c.bf16 %v486, %v479
  %v634 = vpack.c.bf16 %v487, %v480
  %v635 = vpack.c.bf16 %v488, %v481
  %v636 = vpack.c.bf16 %v496, %v489
  %v637 = vpack.c.bf16 %v497, %v490
  %v638 = vpack.c.bf16 %v498, %v491
  %v639 = vpack.c.bf16 %v499, %v492
  %v640 = vpack.c.bf16 %v500, %v493
  %v641 = vpack.c.bf16 %v501, %v494
  %v642 = vpack.c.bf16 %v502, %v495
  %v643 = vpack.c.bf16 %v510, %v503
  %v644 = vpack.c.bf16 %v511, %v504
  %v645 = vpack.c.bf16 %v512, %v505
  %v646 = vpack.c.bf16 %v513, %v506
  %v647 = vpack.c.bf16 %v514, %v507
  %v648 = vpack.c.bf16 %v515, %v508
  %v649 = vpack.c.bf16 %v516, %v509
  %v650 = vpack.c.bf16 %v524, %v517
  %v651 = vpack.c.bf16 %v525, %v518
  %v652 = vpack.c.bf16 %v526, %v519
  %v653 = vpack.c.bf16 %v527, %v520
  %v654 = vpack.c.bf16 %v528, %v521
  %v655 = vpack.c.bf16 %v529, %v522
  %v656 = vpack.c.bf16 %v530, %v523
  %v657 = vpack.c.bf16 %v538, %v531
  %v658 = vpack.c.bf16 %v539, %v532
  %v659 = vpack.c.bf16 %v540, %v533
  %v660 = vpack.c.bf16 %v541, %v534
  %v661 = vpack.c.bf16 %v542, %v535
  %v662 = vpack.c.bf16 %v543, %v536
  %v663 = vpack.c.bf16 %v544, %v537
  %v664 = vpack.c.bf16 %v552, %v545
  %v665 = vpack.c.bf16 %v553, %v546
  %v666 = vpack.c.bf16 %v554, %v547
  %v667 = vpack.c.bf16 %v555, %v548
  %v668 = vpack.c.bf16 %v556, %v549
  %v669 = vpack.c.bf16 %v557, %v550
  %v670 = vpack.c.bf16 %v558, %v551
  %v671 = vpack.c.bf16 %v566, %v559
  %v672 = vpack.c.bf16 %v567, %v560
  %v673 = vpack.c.bf16 %v568, %v561
  %v674 = vpack.c.bf16 %v569, %v562
  %v675 = vpack.c.bf16 %v570, %v563
  %v676 = vpack.c.bf16 %v571, %v564
  %v677 = vpack.c.bf16 %v572, %v565
  %v678 = vpack.c.bf16 %v573, %v573
  %v679 = vpack.c.bf16 %v574, %v574
  %v680 = vpack.c.bf16 %v575, %v575
  %v681 = vpack.c.bf16 %v576, %v576
  %v682 = vpack.c.bf16 %v577, %v577
  %v683 = vpack.c.bf16 %v578, %v578
  %v684 = vpack.c.bf16 %v579, %v579
  %v685 = vld [vmem:[%s0] sm:$0xff]
  %v686 = vld [vmem:[%s0 + $0x8] sm:$0xff]
  %v687 = vld [vmem:[%s0 + $0x10] sm:$0xff]
  %v688 = vld [vmem:[%s0 + $0x18] sm:$0xff]
  %v689 = vld [vmem:[%s0 + $0x20] sm:$0xff]
  %v690 = vld [vmem:[%s0 + $0x28] sm:$0xff]
  %v691 = vld [vmem:[%s0 + $0x30] sm:$0xff]
  %v692 = vld [vmem:[%s0 + $0x38] sm:$0xff]
  %v693 = vld [vmem:[%s0 + $0x40] sm:$0xff]
  %v694 = vld [vmem:[%s0 + $0x48] sm:$0xff]
  %v695 = vld [vmem:[%s0 + $0x50] sm:$0xff]
  %v696 = vld [vmem:[%s0 + $0x58] sm:$0xff]
  %v697 = vld [vmem:[%s0 + $0x60] sm:$0xff]
  %v698 = vld [vmem:[%s0 + $0x68] sm:$0xff]
  %v699 = vld [vmem:[%s0 + $0x70] sm:$0xff]
  %v700 = vld [vmem:[%s0 + $0x78] sm:$0xff]
  %v701 = vld [vmem:[%s0 + $0x80] sm:$0xff]
  %v702 = vld [vmem:[%s0 + $0x88] sm:$0xff]
  %v703 = vld [vmem:[%s0 + $0x90] sm:$0xff]
  %v704 = vld [vmem:[%s0 + $0x98] sm:$0xff]
  %v705 = vld [vmem:[%s0 + $0xa0] sm:$0xff]
  %v706 = vld [vmem:[%s0 + $0xa8] sm:$0xff]
  %v707 = vld [vmem:[%s0 + $0xb0] sm:$0xff]
  %v708 = vld [vmem:[%s0 + $0xb8] sm:$0xff]
  %v709 = vld [vmem:[%s0 + $0xc0] sm:$0xff]
  %v710 = vld [vmem:[%s0 + $0xc8] sm:$0xff]
  %v711 = vld [vmem:[%s0 + $0xd0] sm:$0xff]
  %v712 = vld [vmem:[%s0 + $0xd8] sm:$0xff]
  %v713 = vld [vmem:[%s0 + $0xe0] sm:$0xff]
  %v714 = vld [vmem:[%s0 + $0xe8] sm:$0xff]
  %v715 = vld [vmem:[%s0 + $0xf0] sm:$0xff]
  %v716 = vld [vmem:[%s0 + $0xf8] sm:$0xff]
  %v717 = vld [vmem:[%s0 + $0x100] sm:$0xff]
  %v718 = vld [vmem:[%s0 + $0x108] sm:$0xff]
  %v719 = vld [vmem:[%s0 + $0x110] sm:$0xff]
  %v720 = vld [vmem:[%s0 + $0x118] sm:$0xff]
  %v721 = vld [vmem:[%s0 + $0x120] sm:$0xff]
  %v722 = vld [vmem:[%s0 + $0x128] sm:$0xff]
  %v723 = vld [vmem:[%s0 + $0x130] sm:$0xff]
  %v724 = vld [vmem:[%s0 + $0x138] sm:$0xff]
  %v725 = vld [vmem:[%s0 + $0x140] sm:$0xff]
  %v726 = vld [vmem:[%s0 + $0x148] sm:$0xff]
  %v727 = vld [vmem:[%s0 + $0x150] sm:$0xff]
  %v728 = vld [vmem:[%s0 + $0x158] sm:$0xff]
  %v729 = vld [vmem:[%s0 + $0x160] sm:$0xff]
  %v730 = vld [vmem:[%s0 + $0x168] sm:$0xff]
  %v731 = vld [vmem:[%s0 + $0x170] sm:$0xff]
  %v732 = vld [vmem:[%s0 + $0x178] sm:$0xff]
  %v733 = vld [vmem:[%s0 + $0x180] sm:$0xff]
  %v734 = vld [vmem:[%s0 + $0x188] sm:$0xff]
  %v735 = vld [vmem:[%s0 + $0x190] sm:$0xff]
  %v736 = vld [vmem:[%s0 + $0x198] sm:$0xff]
  %v737 = vld [vmem:[%s0 + $0x1a0] sm:$0xff]
  %v738 = vld [vmem:[%s0 + $0x1a8] sm:$0xff]
  %v739 = vld [vmem:[%s0 + $0x1b0] sm:$0xff]
  %v740 = vld [vmem:[%s0 + $0x1b8] sm:$0xff]
  %v741 = vld [vmem:[%s0 + $0x1c0] sm:$0xff]
  %v742 = vld [vmem:[%s0 + $0x1c8] sm:$0xff]
  %v743 = vld [vmem:[%s0 + $0x1d0] sm:$0xff]
  %v744 = vld [vmem:[%s0 + $0x1d8] sm:$0xff]
  %v745 = vld [vmem:[%s0 + $0x1e0] sm:$0xff]
  %v746 = vld [vmem:[%s0 + $0x1e8] sm:$0xff]
  %v747 = vld [vmem:[%s0 + $0x1f0] sm:$0xff]
  %v748 = vld [vmem:[%s0 + $0x1f8] sm:$0xff]
  %v749 = vld [vmem:[%s0 + $0x200] sm:$0xff]
  %v750 = vld [vmem:[%s0 + $0x208] sm:$0xff]
  %v751 = vld [vmem:[%s0 + $0x210] sm:$0xff]
  %v752 = vld [vmem:[%s0 + $0x218] sm:$0xff]
  %v753 = vld [vmem:[%s0 + $0x220] sm:$0xff]
  %v754 = vld [vmem:[%s0 + $0x228] sm:$0xff]
  %v755 = vld [vmem:[%s0 + $0x230] sm:$0xff]
  %v756 = vld [vmem:[%s0 + $0x238] sm:$0xff]
  %v757 = vld [vmem:[%s0 + $0x240] sm:$0xff]
  %v758 = vld [vmem:[%s0 + $0x248] sm:$0xff]
  %v759 = vld [vmem:[%s0 + $0x250] sm:$0xff]
  %v760 = vld [vmem:[%s0 + $0x258] sm:$0xff]
  %v761 = vld [vmem:[%s0 + $0x260] sm:$0xff]
  %v762 = vld [vmem:[%s0 + $0x268] sm:$0xff]
  %v763 = vld [vmem:[%s0 + $0x270] sm:$0xff]
  %v764 = vld [vmem:[%s0 + $0x278] sm:$0xff]
  %v765 = vld [vmem:[%s0 + $0x280] sm:$0xff]
  %v766 = vld [vmem:[%s0 + $0x288] sm:$0xff]
  %v767 = vld [vmem:[%s0 + $0x290] sm:$0xff]
  %v768 = vld [vmem:[%s0 + $0x298] sm:$0xff]
  %v769 = vld [vmem:[%s0 + $0x2a0] sm:$0xff]
  %v770 = vld [vmem:[%s0 + $0x2a8] sm:$0xff]
  %v771 = vld [vmem:[%s0 + $0x2b0] sm:$0xff]
  %v772 = vld [vmem:[%s0 + $0x2b8] sm:$0xff]
  %v773 = vld [vmem:[%s0 + $0x2c0] sm:$0xff]
  %v774 = vld [vmem:[%s0 + $0x2c8] sm:$0xff]
  %v775 = vld [vmem:[%s0 + $0x2d0] sm:$0xff]
  %v776 = vld [vmem:[%s0 + $0x2d8] sm:$0xff]
  %v777 = vld [vmem:[%s0 + $0x2e0] sm:$0xff]
  %v778 = vld [vmem:[%s0 + $0x2e8] sm:$0xff]
  %v779 = vld [vmem:[%s0 + $0x2f0] sm:$0xff]
  %v780 = vld [vmem:[%s0 + $0x2f8] sm:$0xff]
  %v781 = vld [vmem:[%s0 + $0x300] sm:$0xff]
  %v782 = vld [vmem:[%s0 + $0x308] sm:$0xff]
  %v783 = vld [vmem:[%s0 + $0x310] sm:$0xff]
  %v784 = vld [vmem:[%s0 + $0x318] sm:$0xff]
  %v785 = vld [vmem:[%s0 + $0x320] sm:$0xff]
  %v786 = vld [vmem:[%s0 + $0x328] sm:$0xff]
  %v787 = vpack.c.bf16 %v686, %v685
  %v788 = vpack.c.bf16 %v688, %v687
  %v789 = vpack.c.bf16 %v690, %v689
  %v790 = vpack.c.bf16 %v692, %v691
  %v791 = vpack.c.bf16 %v694, %v693
  %v792 = vpack.c.bf16 %v696, %v695
  %v793 = vpack.c.bf16 %v698, %v697
  %v794 = vpack.c.bf16 %v700, %v699
  %v795 = vpack.c.bf16 %v702, %v701
  %v796 = vpack.c.bf16 %v704, %v703
  %v797 = vpack.c.bf16 %v706, %v705
  %v798 = vpack.c.bf16 %v708, %v707
  %v799 = vpack.c.bf16 %v710, %v709
  %v800 = vpack.c.bf16 %v712, %v711
  %v801 = vpack.c.bf16 %v714, %v713
  %v802 = vpack.c.bf16 %v716, %v715
  %v803 = vpack.c.bf16 %v718, %v717
  %v804 = vpack.c.bf16 %v720, %v719
  %v805 = vpack.c.bf16 %v722, %v721
  %v806 = vpack.c.bf16 %v724, %v723
  %v807 = vpack.c.bf16 %v726, %v725
  %v808 = vpack.c.bf16 %v728, %v727
  %v809 = vpack.c.bf16 %v730, %v729
  %v810 = vpack.c.bf16 %v732, %v731
  %v811 = vpack.c.bf16 %v734, %v733
  %v812 = vpack.c.bf16 %v736, %v735
  %v813 = vpack.c.bf16 %v738, %v737
  %v814 = vpack.c.bf16 %v740, %v739
  %v815 = vpack.c.bf16 %v742, %v741
  %v816 = vpack.c.bf16 %v744, %v743
  %v817 = vpack.c.bf16 %v746, %v745
  %v818 = vpack.c.bf16 %v748, %v747
  %v819 = vpack.c.bf16 %v750, %v749
  %v820 = vpack.c.bf16 %v752, %v751
  %v821 = vpack.c.bf16 %v754, %v753
  %v822 = vpack.c.bf16 %v756, %v755
  %v823 = vpack.c.bf16 %v758, %v757
  %v824 = vpack.c.bf16 %v760, %v759
  %v825 = vpack.c.bf16 %v762, %v761
  %v826 = vpack.c.bf16 %v764, %v763
  %v827 = vpack.c.bf16 %v766, %v765
  %v828 = vpack.c.bf16 %v768, %v767
  %v829 = vpack.c.bf16 %v770, %v769
  %v830 = vpack.c.bf16 %v772, %v771
  %v831 = vpack.c.bf16 %v774, %v773
  %v832 = vpack.c.bf16 %v776, %v775
  %v833 = vpack.c.bf16 %v778, %v777
  %v834 = vpack.c.bf16 %v780, %v779
  %v835 = vpack.c.bf16 %v782, %v781
  %v836 = vpack.c.bf16 %v784, %v783
  %v837 = vpack.c.bf16 %v786, %v785
  %vm838 = vcmask 392192
  %v840 = vsel %vm838, %v586, 0
  %v843 = vsel %vm838, %v593, 0
  %v846 = vsel %vm838, %v600, 0
  %v849 = vsel %vm838, %v607, 0
  %v852 = vsel %vm838, %v614, 0
  %v855 = vsel %vm838, %v621, 0
  %v858 = vsel %vm838, %v628, 0
  %v861 = vsel %vm838, %v635, 0
  %v864 = vsel %vm838, %v642, 0
  %v867 = vsel %vm838, %v649, 0
  %v870 = vsel %vm838, %v656, 0
  %v873 = vsel %vm838, %v663, 0
  %v876 = vsel %vm838, %v670, 0
  %v879 = vsel %vm838, %v677, 0
  %v882 = vsel %vm838, %v684, 0
  %884 = vmatprep.subr.bf16.mxu0 0
  %885 = vmatpush1.bf16.msra.mxu0 %v787
  %886 = vmatprep.subr.bf16.mxu0 0
  %887 = vmatpush1.bf16.msra.mxu0 %v788
  %888 = vmatprep.subr.bf16.mxu0 0
  %889 = vmatpush1.bf16.msra.mxu0 %v789
  %890 = vmatprep.subr.bf16.mxu0 0
  %891 = vmatpush1.bf16.msra.mxu0 %v790
  %892 = vmatprep.subr.bf16.mxu0 0
  %893 = vmatpush1.bf16.msra.mxu0 %v791
  %894 = vmatprep.subr.bf16.mxu0 0
  %895 = vmatpush1.bf16.msra.mxu0 %v792
  %896 = vmatprep.subr.bf16.mxu0 0
  %897 = vmatpush1.bf16.msra.mxu0 %v793
  %898 = vmatprep.subr.bf16.mxu0 0
  %899 = vmatpush1.bf16.msra.mxu0 %v794
  %900 = vmatprep.subr.bf16.mxu0 0
  %901 = vmatpush1.bf16.msra.mxu0 %v795
  %902 = vmatprep.subr.bf16.mxu0 0
  %903 = vmatpush1.bf16.msra.mxu0 %v796
  %904 = vmatprep.subr.bf16.mxu0 0
  %905 = vmatpush1.bf16.msra.mxu0 %v797
  %906 = vmatprep.subr.bf16.mxu0 0
  %907 = vmatpush1.bf16.msra.mxu0 %v798
  %908 = vmatprep.subr.bf16.mxu0 0
  %909 = vmatpush1.bf16.msra.mxu0 %v799
  %910 = vmatprep.subr.bf16.mxu0 0
  %911 = vmatpush1.bf16.msra.mxu0 %v800
  %912 = vmatprep.subr.bf16.mxu0 0
  %913 = vmatpush1.bf16.msra.mxu0 %v801
  %914 = vmatprep.subr.bf16.mxu0 0
  %915 = vmatpush1.bf16.msra.mxu0 %v802
  %916 = vmatprep.mubr.bf16.mxu0 %v581
  %917 = vmatmul.mubr.bf16.gmra.mrb[0].mxu0 %v580
  %v918 = vpop.f32.mrb[0].mxu0
  %v919 = vadd.f32 0.0, %v918
  %v920 = vpop.f32.mrb[0].mxu0
  %v921 = vpop.f32.mrb[0].mxu0
  %v922 = vadd.f32 0.0, %v921
  %v923 = vpop.f32.mrb[0].mxu0
  %924 = vmatprep.mubr.bf16.mxu0 %v588
  %925 = vmatmul.mubr.bf16.gmra.mrb[0].mxu0 %v587
  %v926 = vpop.f32.mrb[0].mxu0
  %v927 = vadd.f32 0.0, %v926
  %v928 = vpop.f32.mrb[0].mxu0
  %v929 = vpop.f32.mrb[0].mxu0
  %v930 = vadd.f32 0.0, %v929
  %v931 = vpop.f32.mrb[0].mxu0
  %932 = vmatprep.mubr.bf16.mxu0 %v595
  %933 = vmatmul.mubr.bf16.gmra.mrb[0].mxu0 %v594
  %v934 = vpop.f32.mrb[0].mxu0
  %v935 = vadd.f32 0.0, %v934
  %v936 = vpop.f32.mrb[0].mxu0
  %v937 = vpop.f32.mrb[0].mxu0
  %v938 = vadd.f32 0.0, %v937
  %v939 = vpop.f32.mrb[0].mxu0
  %940 = vmatprep.mubr.bf16.mxu0 %v602
  %941 = vmatmul.mubr.bf16.gmra.mrb[0].mxu0 %v601
  %v942 = vpop.f32.mrb[0].mxu0
  %v943 = vadd.f32 0.0, %v942
  %v944 = vpop.f32.mrb[0].mxu0
  %v945 = vpop.f32.mrb[0].mxu0
  %v946 = vadd.f32 0.0, %v945
  %v947 = vpop.f32.mrb[0].mxu0
  %948 = vmatprep.mubr.bf16.mxu0 %v609
  %949 = vmatmul.mubr.bf16.gmra.mrb[0].mxu0 %v608
  %v950 = vpop.f32.mrb[0].mxu0
  %v951 = vadd.f32 0.0, %v950
  %v952 = vpop.f32.mrb[0].mxu0
  %v953 = vpop.f32.mrb[0].mxu0
  %v954 = vadd.f32 0.0, %v953
  %v955 = vpop.f32.mrb[0].mxu0
  %956 = vmatprep.mubr.bf16.mxu0 %v616
  %957 = vmatmul.mubr.bf16.gmra.mrb[0].mxu0 %v615
  %v958 = vpop.f32.mrb[0].mxu0
  %v959 = vadd.f32 0.0, %v958
  %v960 = vpop.f32.mrb[0].mxu0
  %v961 = vpop.f32.mrb[0].mxu0
  %v962 = vadd.f32 0.0, %v961
  %v963 = vpop.f32.mrb[0].mxu0
  %964 = vmatprep.mubr.bf16.mxu0 %v623
  %965 = vmatmul.mubr.bf16.gmra.mrb[0].mxu0 %v622
  %v966 = vpop.f32.mrb[0].mxu0
  %v967 = vadd.f32 0.0, %v966
  %v968 = vpop.f32.mrb[0].mxu0
  %v969 = vpop.f32.mrb[0].mxu0
  %v970 = vadd.f32 0.0, %v969
  %v971 = vpop.f32.mrb[0].mxu0
  %972 = vmatprep.mubr.bf16.mxu0 %v630
  %973 = vmatmul.mubr.bf16.gmra.mrb[0].mxu0 %v629
  %v974 = vpop.f32.mrb[0].mxu0
  %v975 = vadd.f32 0.0, %v974
  %v976 = vpop.f32.mrb[0].mxu0
  %v977 = vpop.f32.mrb[0].mxu0
  %v978 = vadd.f32 0.0, %v977
  %v979 = vpop.f32.mrb[0].mxu0
  %980 = vmatprep.mubr.bf16.mxu0 %v637
  %981 = vmatmul.mubr.bf16.gmra.mrb[0].mxu0 %v636
  %v982 = vpop.f32.mrb[0].mxu0
  %v983 = vadd.f32 0.0, %v982
  %v984 = vpop.f32.mrb[0].mxu0
  %v985 = vpop.f32.mrb[0].mxu0
  %v986 = vadd.f32 0.0, %v985
  %v987 = vpop.f32.mrb[0].mxu0
  %988 = vmatprep.mubr.bf16.mxu0 %v644
  %989 = vmatmul.mubr.bf16.gmra.mrb[0].mxu0 %v643
  %v990 = vpop.f32.mrb[0].mxu0
  %v991 = vadd.f32 0.0, %v990
  %v992 = vpop.f32.mrb[0].mxu0
  %v993 = vpop.f32.mrb[0].mxu0
  %v994 = vadd.f32 0.0, %v993
  %v995 = vpop.f32.mrb[0].mxu0
  %996 = vmatprep.mubr.bf16.mxu0 %v651
  %997 = vmatmul.mubr.bf16.gmra.mrb[0].mxu0 %v650
  %v998 = vpop.f32.mrb[0].mxu0
  %v999 = vadd.f32 0.0, %v998
  %v1000 = vpop.f32.mrb[0].mxu0
  %v1001 = vpop.f32.mrb[0].mxu0
  %v1002 = vadd.f32 0.0, %v1001
  %v1003 = vpop.f32.mrb[0].mxu0
  %1004 = vmatprep.mubr.bf16.mxu0 %v658
  %1005 = vmatmul.mubr.bf16.gmra.mrb[0].mxu0 %v657
  %v1006 = vpop.f32.mrb[0].mxu0
  %v1007 = vadd.f32 0.0, %v1006
  %v1008 = vpop.f32.mrb[0].mxu0
  %v1009 = vpop.f32.mrb[0].mxu0
  %v1010 = vadd.f32 0.0, %v1009
  %v1011 = vpop.f32.mrb[0].mxu0
  %1012 = vmatprep.mubr.bf16.mxu0 %v665
  %1013 = vmatmul.mubr.bf16.gmra.mrb[0].mxu0 %v664
  %v1014 = vpop.f32.mrb[0].mxu0
  %v1015 = vadd.f32 0.0, %v1014
  %v1016 = vpop.f32.mrb[0].mxu0
  %v1017 = vpop.f32.mrb[0].mxu0
  %v1018 = vadd.f32 0.0, %v1017
  %v1019 = vpop.f32.mrb[0].mxu0
  %1020 = vmatprep.mubr.bf16.mxu0 %v672
  %1021 = vmatmul.mubr.bf16.gmra.mrb[0].mxu0 %v671
  %v1022 = vpop.f32.mrb[0].mxu0
  %v1023 = vadd.f32 0.0, %v1022
  %v1024 = vpop.f32.mrb[0].mxu0
  %v1025 = vpop.f32.mrb[0].mxu0
  %v1026 = vadd.f32 0.0, %v1025
  %v1027 = vpop.f32.mrb[0].mxu0
  %1028 = vmatprep.mubr.bf16.mxu0 %v679
  %1029 = vmatmul.mubr.bf16.gmra.mrb[0].mxu0 %v678
  %v1030 = vpop.f32.mrb[0].mxu0
  %v1031 = vadd.f32 0.0, %v1030
  %v1032 = vpop.f32.mrb[0].mxu0
  %v1033 = vpop.f32.mrb[0].mxu0
  %v1034 = vpop.f32.mrb[0].mxu0
  %1035 = vdwg.mxu0
  %1036 = vmatprep.subr.bf16.mxu0 0
  %1037 = vmatpush1.bf16.msra.mxu0 %v803
  %1038 = vmatprep.subr.bf16.mxu0 0
  %1039 = vmatpush1.bf16.msra.mxu0 %v804
  %1040 = vmatprep.subr.bf16.mxu0 0
  %1041 = vmatpush1.bf16.msra.mxu0 %v805
  %1042 = vmatprep.subr.bf16.mxu0 0
  %1043 = vmatpush1.bf16.msra.mxu0 %v806
  %1044 = vmatprep.subr.bf16.mxu0 0
  %1045 = vmatpush1.bf16.msra.mxu0 %v807
  %1046 = vmatprep.subr.bf16.mxu0 0
  %1047 = vmatpush1.bf16.msra.mxu0 %v808
  %1048 = vmatprep.subr.bf16.mxu0 0
  %1049 = vmatpush1.bf16.msra.mxu0 %v809
  %1050 = vmatprep.subr.bf16.mxu0 0
  %1051 = vmatpush1.bf16.msra.mxu0 %v810
  %1052 = vmatprep.subr.bf16.mxu0 0
  %1053 = vmatpush1.bf16.msra.mxu0 %v811
  %1054 = vmatprep.subr.bf16.mxu0 0
  %1055 = vmatpush1.bf16.msra.mxu0 %v812
  %1056 = vmatprep.subr.bf16.mxu0 0
  %1057 = vmatpush1.bf16.msra.mxu0 %v813
  %1058 = vmatprep.subr.bf16.mxu0 0
  %1059 = vmatpush1.bf16.msra.mxu0 %v814
  %1060 = vmatprep.subr.bf16.mxu0 0
  %1061 = vmatpush1.bf16.msra.mxu0 %v815
  %1062 = vmatprep.subr.bf16.mxu0 0
  %1063 = vmatpush1.bf16.msra.mxu0 %v816
  %1064 = vmatprep.subr.bf16.mxu0 0
  %1065 = vmatpush1.bf16.msra.mxu0 %v817
  %1066 = vmatprep.subr.bf16.mxu0 0
  %1067 = vmatpush1.bf16.msra.mxu0 %v818
  %1068 = vmatprep.mubr.bf16.mxu0 %v583
  %1069 = vmatmul.mubr.bf16.gmra.mrb[0].mxu0 %v582
  %v1070 = vpop.f32.mrb[0].mxu0
  %v1071 = vadd.f32 %v919, %v1070
  %v1072 = vpop.f32.mrb[0].mxu0
  %v1073 = vpop.f32.mrb[0].mxu0
  %v1074 = vadd.f32 %v922, %v1073
  %v1075 = vpop.f32.mrb[0].mxu0
  %1076 = vmatprep.mubr.bf16.mxu0 %v590
  %1077 = vmatmul.mubr.bf16.gmra.mrb[0].mxu0 %v589
  %v1078 = vpop.f32.mrb[0].mxu0
  %v1079 = vadd.f32 %v927, %v1078
  %v1080 = vpop.f32.mrb[0].mxu0
  %v1081 = vpop.f32.mrb[0].mxu0
  %v1082 = vadd.f32 %v930, %v1081
  %v1083 = vpop.f32.mrb[0].mxu0
  %1084 = vmatprep.mubr.bf16.mxu0 %v597
  %1085 = vmatmul.mubr.bf16.gmra.mrb[0].mxu0 %v596
  %v1086 = vpop.f32.mrb[0].mxu0
  %v1087 = vadd.f32 %v935, %v1086
  %v1088 = vpop.f32.mrb[0].mxu0
  %v1089 = vpop.f32.mrb[0].mxu0
  %v1090 = vadd.f32 %v938, %v1089
  %v1091 = vpop.f32.mrb[0].mxu0
  %1092 = vmatprep.mubr.bf16.mxu0 %v604
  %1093 = vmatmul.mubr.bf16.gmra.mrb[0].mxu0 %v603
  %v1094 = vpop.f32.mrb[0].mxu0
  %v1095 = vadd.f32 %v943, %v1094
  %v1096 = vpop.f32.mrb[0].mxu0
  %v1097 = vpop.f32.mrb[0].mxu0
  %v1098 = vadd.f32 %v946, %v1097
  %v1099 = vpop.f32.mrb[0].mxu0
  %1100 = vmatprep.mubr.bf16.mxu0 %v611
  %1101 = vmatmul.mubr.bf16.gmra.mrb[0].mxu0 %v610
  %v1102 = vpop.f32.mrb[0].mxu0
  %v1103 = vadd.f32 %v951, %v1102
  %v1104 = vpop.f32.mrb[0].mxu0
  %v1105 = vpop.f32.mrb[0].mxu0
  %v1106 = vadd.f32 %v954, %v1105
  %v1107 = vpop.f32.mrb[0].mxu0
  %1108 = vmatprep.mubr.bf16.mxu0 %v618
  %1109 = vmatmul.mubr.bf16.gmra.mrb[0].mxu0 %v617
  %v1110 = vpop.f32.mrb[0].mxu0
  %v1111 = vadd.f32 %v959, %v1110
  %v1112 = vpop.f32.mrb[0].mxu0
  %v1113 = vpop.f32.mrb[0].mxu0
  %v1114 = vadd.f32 %v962, %v1113
  %v1115 = vpop.f32.mrb[0].mxu0
  %1116 = vmatprep.mubr.bf16.mxu0 %v625
  %1117 = vmatmul.mubr.bf16.gmra.mrb[0].mxu0 %v624
  %v1118 = vpop.f32.mrb[0].mxu0
  %v1119 = vadd.f32 %v967, %v1118
  %v1120 = vpop.f32.mrb[0].mxu0
  %v1121 = vpop.f32.mrb[0].mxu0
  %v1122 = vadd.f32 %v970, %v1121
  %v1123 = vpop.f32.mrb[0].mxu0
  %1124 = vmatprep.mubr.bf16.mxu0 %v632
  %1125 = vmatmul.mubr.bf16.gmra.mrb[0].mxu0 %v631
  %v1126 = vpop.f32.mrb[0].mxu0
  %v1127 = vadd.f32 %v975, %v1126
  %v1128 = vpop.f32.mrb[0].mxu0
  %v1129 = vpop.f32.mrb[0].mxu0
  %v1130 = vadd.f32 %v978, %v1129
  %v1131 = vpop.f32.mrb[0].mxu0
  %1132 = vmatprep.mubr.bf16.mxu0 %v639
  %1133 = vmatmul.mubr.bf16.gmra.mrb[0].mxu0 %v638
  %v1134 = vpop.f32.mrb[0].mxu0
  %v1135 = vadd.f32 %v983, %v1134
  %v1136 = vpop.f32.mrb[0].mxu0
  %v1137 = vpop.f32.mrb[0].mxu0
  %v1138 = vadd.f32 %v986, %v1137
  %v1139 = vpop.f32.mrb[0].mxu0
  %1140 = vmatprep.mubr.bf16.mxu0 %v646
  %1141 = vmatmul.mubr.bf16.gmra.mrb[0].mxu0 %v645
  %v1142 = vpop.f32.mrb[0].mxu0
  %v1143 = vadd.f32 %v991, %v1142
  %v1144 = vpop.f32.mrb[0].mxu0
  %v1145 = vpop.f32.mrb[0].mxu0
  %v1146 = vadd.f32 %v994, %v1145
  %v1147 = vpop.f32.mrb[0].mxu0
  %1148 = vmatprep.mubr.bf16.mxu0 %v653
  %1149 = vmatmul.mubr.bf16.gmra.mrb[0].mxu0 %v652
  %v1150 = vpop.f32.mrb[0].mxu0
  %v1151 = vadd.f32 %v999, %v1150
  %v1152 = vpop.f32.mrb[0].mxu0
  %v1153 = vpop.f32.mrb[0].mxu0
  %v1154 = vadd.f32 %v1002, %v1153
  %v1155 = vpop.f32.mrb[0].mxu0
  %1156 = vmatprep.mubr.bf16.mxu0 %v660
  %1157 = vmatmul.mubr.bf16.gmra.mrb[0].mxu0 %v659
  %v1158 = vpop.f32.mrb[0].mxu0
  %v1159 = vadd.f32 %v1007, %v1158
  %v1160 = vpop.f32.mrb[0].mxu0
  %v1161 = vpop.f32.mrb[0].mxu0
  %v1162 = vadd.f32 %v1010, %v1161
  %v1163 = vpop.f32.mrb[0].mxu0
  %1164 = vmatprep.mubr.bf16.mxu0 %v667
  %1165 = vmatmul.mubr.bf16.gmra.mrb[0].mxu0 %v666
  %v1166 = vpop.f32.mrb[0].mxu0
  %v1167 = vadd.f32 %v1015, %v1166
  %v1168 = vpop.f32.mrb[0].mxu0
  %v1169 = vpop.f32.mrb[0].mxu0
  %v1170 = vadd.f32 %v1018, %v1169
  %v1171 = vpop.f32.mrb[0].mxu0
  %1172 = vmatprep.mubr.bf16.mxu0 %v674
  %1173 = vmatmul.mubr.bf16.gmra.mrb[0].mxu0 %v673
  %v1174 = vpop.f32.mrb[0].mxu0
  %v1175 = vadd.f32 %v1023, %v1174
  %v1176 = vpop.f32.mrb[0].mxu0
  %v1177 = vpop.f32.mrb[0].mxu0
  %v1178 = vadd.f32 %v1026, %v1177
  %v1179 = vpop.f32.mrb[0].mxu0
  %1180 = vmatprep.mubr.bf16.mxu0 %v681
  %1181 = vmatmul.mubr.bf16.gmra.mrb[0].mxu0 %v680
  %v1182 = vpop.f32.mrb[0].mxu0
  %v1183 = vadd.f32 %v1031, %v1182
  %v1184 = vpop.f32.mrb[0].mxu0
  %v1185 = vpop.f32.mrb[0].mxu0
  %v1186 = vpop.f32.mrb[0].mxu0
  %1187 = vdwg.mxu0
  %1188 = vmatprep.subr.bf16.mxu0 0
  %1189 = vmatpush1.bf16.msra.mxu0 %v819
  %1190 = vmatprep.subr.bf16.mxu0 0
  %1191 = vmatpush1.bf16.msra.mxu0 %v820
  %1192 = vmatprep.subr.bf16.mxu0 0
  %1193 = vmatpush1.bf16.msra.mxu0 %v821
  %1194 = vmatprep.subr.bf16.mxu0 0
  %1195 = vmatpush1.bf16.msra.mxu0 %v822
  %1196 = vmatprep.subr.bf16.mxu0 0
  %1197 = vmatpush1.bf16.msra.mxu0 %v823
  %1198 = vmatprep.subr.bf16.mxu0 0
  %1199 = vmatpush1.bf16.msra.mxu0 %v824
  %1200 = vmatprep.subr.bf16.mxu0 0
  %1201 = vmatpush1.bf16.msra.mxu0 %v825
  %1202 = vmatprep.subr.bf16.mxu0 0
  %1203 = vmatpush1.bf16.msra.mxu0 %v826
  %1204 = vmatprep.subr.bf16.mxu0 0
  %1205 = vmatpush1.bf16.msra.mxu0 %v827
  %1206 = vmatprep.subr.bf16.mxu0 0
  %1207 = vmatpush1.bf16.msra.mxu0 %v828
  %1208 = vmatprep.subr.bf16.mxu0 0
  %1209 = vmatpush1.bf16.msra.mxu0 %v829
  %1210 = vmatprep.subr.bf16.mxu0 0
  %1211 = vmatpush1.bf16.msra.mxu0 %v830
  %1212 = vmatprep.subr.bf16.mxu0 0
  %1213 = vmatpush1.bf16.msra.mxu0 %v831
  %1214 = vmatprep.subr.bf16.mxu0 0
  %1215 = vmatpush1.bf16.msra.mxu0 %v832
  %1216 = vmatprep.subr.bf16.mxu0 0
  %1217 = vmatpush1.bf16.msra.mxu0 %v833
  %1218 = vmatprep.subr.bf16.mxu0 0
  %1219 = vmatpush1.bf16.msra.mxu0 %v834
  %1220 = vmatprep.mubr.bf16.mxu0 %v585
  %1221 = vmatmul.mubr.bf16.gmra.mrb[0].mxu0 %v584
  %v1222 = vpop.f32.mrb[0].mxu0
  %v1223 = vadd.f32 %v1071, %v1222
  %v1224 = vpop.f32.mrb[0].mxu0
  %v1225 = vpop.f32.mrb[0].mxu0
  %v1226 = vadd.f32 %v1074, %v1225
  %v1227 = vpop.f32.mrb[0].mxu0
  %1228 = vmatprep.mubr.bf16.mxu0 %v592
  %1229 = vmatmul.mubr.bf16.gmra.mrb[0].mxu0 %v591
  %v1230 = vpop.f32.mrb[0].mxu0
  %v1231 = vadd.f32 %v1079, %v1230
  %v1232 = vpop.f32.mrb[0].mxu0
  %v1233 = vpop.f32.mrb[0].mxu0
  %v1234 = vadd.f32 %v1082, %v1233
  %v1235 = vpop.f32.mrb[0].mxu0
  %1236 = vmatprep.mubr.bf16.mxu0 %v599
  %1237 = vmatmul.mubr.bf16.gmra.mrb[0].mxu0 %v598
  %v1238 = vpop.f32.mrb[0].mxu0
  %v1239 = vadd.f32 %v1087, %v1238
  %v1240 = vpop.f32.mrb[0].mxu0
  %v1241 = vpop.f32.mrb[0].mxu0
  %v1242 = vadd.f32 %v1090, %v1241
  %v1243 = vpop.f32.mrb[0].mxu0
  %1244 = vmatprep.mubr.bf16.mxu0 %v606
  %1245 = vmatmul.mubr.bf16.gmra.mrb[0].mxu0 %v605
  %v1246 = vpop.f32.mrb[0].mxu0
  %v1247 = vadd.f32 %v1095, %v1246
  %v1248 = vpop.f32.mrb[0].mxu0
  %v1249 = vpop.f32.mrb[0].mxu0
  %v1250 = vadd.f32 %v1098, %v1249
  %v1251 = vpop.f32.mrb[0].mxu0
  %1252 = vmatprep.mubr.bf16.mxu0 %v613
  %1253 = vmatmul.mubr.bf16.gmra.mrb[0].mxu0 %v612
  %v1254 = vpop.f32.mrb[0].mxu0
  %v1255 = vadd.f32 %v1103, %v1254
  %v1256 = vpop.f32.mrb[0].mxu0
  %v1257 = vpop.f32.mrb[0].mxu0
  %v1258 = vadd.f32 %v1106, %v1257
  %v1259 = vpop.f32.mrb[0].mxu0
  %1260 = vmatprep.mubr.bf16.mxu0 %v620
  %1261 = vmatmul.mubr.bf16.gmra.mrb[0].mxu0 %v619
  %v1262 = vpop.f32.mrb[0].mxu0
  %v1263 = vadd.f32 %v1111, %v1262
  %v1264 = vpop.f32.mrb[0].mxu0
  %v1265 = vpop.f32.mrb[0].mxu0
  %v1266 = vadd.f32 %v1114, %v1265
  %v1267 = vpop.f32.mrb[0].mxu0
  %1268 = vmatprep.mubr.bf16.mxu0 %v627
  %1269 = vmatmul.mubr.bf16.gmra.mrb[0].mxu0 %v626
  %v1270 = vpop.f32.mrb[0].mxu0
  %v1271 = vadd.f32 %v1119, %v1270
  %v1272 = vpop.f32.mrb[0].mxu0
  %v1273 = vpop.f32.mrb[0].mxu0
  %v1274 = vadd.f32 %v1122, %v1273
  %v1275 = vpop.f32.mrb[0].mxu0
  %1276 = vmatprep.mubr.bf16.mxu0 %v634
  %1277 = vmatmul.mubr.bf16.gmra.mrb[0].mxu0 %v633
  %v1278 = vpop.f32.mrb[0].mxu0
  %v1279 = vadd.f32 %v1127, %v1278
  %v1280 = vpop.f32.mrb[0].mxu0
  %v1281 = vpop.f32.mrb[0].mxu0
  %v1282 = vadd.f32 %v1130, %v1281
  %v1283 = vpop.f32.mrb[0].mxu0
  %1284 = vmatprep.mubr.bf16.mxu0 %v641
  %1285 = vmatmul.mubr.bf16.gmra.mrb[0].mxu0 %v640
  %v1286 = vpop.f32.mrb[0].mxu0
  %v1287 = vadd.f32 %v1135, %v1286
  %v1288 = vpop.f32.mrb[0].mxu0
  %v1289 = vpop.f32.mrb[0].mxu0
  %v1290 = vadd.f32 %v1138, %v1289
  %v1291 = vpop.f32.mrb[0].mxu0
  %1292 = vmatprep.mubr.bf16.mxu0 %v648
  %1293 = vmatmul.mubr.bf16.gmra.mrb[0].mxu0 %v647
  %v1294 = vpop.f32.mrb[0].mxu0
  %v1295 = vadd.f32 %v1143, %v1294
  %v1296 = vpop.f32.mrb[0].mxu0
  %v1297 = vpop.f32.mrb[0].mxu0
  %v1298 = vadd.f32 %v1146, %v1297
  %v1299 = vpop.f32.mrb[0].mxu0
  %1300 = vmatprep.mubr.bf16.mxu0 %v655
  %1301 = vmatmul.mubr.bf16.gmra.mrb[0].mxu0 %v654
  %v1302 = vpop.f32.mrb[0].mxu0
  %v1303 = vadd.f32 %v1151, %v1302
  %v1304 = vpop.f32.mrb[0].mxu0
  %v1305 = vpop.f32.mrb[0].mxu0
  %v1306 = vadd.f32 %v1154, %v1305
  %v1307 = vpop.f32.mrb[0].mxu0
  %1308 = vmatprep.mubr.bf16.mxu0 %v662
  %1309 = vmatmul.mubr.bf16.gmra.mrb[0].mxu0 %v661
  %v1310 = vpop.f32.mrb[0].mxu0
  %v1311 = vadd.f32 %v1159, %v1310
  %v1312 = vpop.f32.mrb[0].mxu0
  %v1313 = vpop.f32.mrb[0].mxu0
  %v1314 = vadd.f32 %v1162, %v1313
  %v1315 = vpop.f32.mrb[0].mxu0
  %1316 = vmatprep.mubr.bf16.mxu0 %v669
  %1317 = vmatmul.mubr.bf16.gmra.mrb[0].mxu0 %v668
  %v1318 = vpop.f32.mrb[0].mxu0
  %v1319 = vadd.f32 %v1167, %v1318
  %v1320 = vpop.f32.mrb[0].mxu0
  %v1321 = vpop.f32.mrb[0].mxu0
  %v1322 = vadd.f32 %v1170, %v1321
  %v1323 = vpop.f32.mrb[0].mxu0
  %1324 = vmatprep.mubr.bf16.mxu0 %v676
  %1325 = vmatmul.mubr.bf16.gmra.mrb[0].mxu0 %v675
  %v1326 = vpop.f32.mrb[0].mxu0
  %v1327 = vadd.f32 %v1175, %v1326
  %v1328 = vpop.f32.mrb[0].mxu0
  %v1329 = vpop.f32.mrb[0].mxu0
  %v1330 = vadd.f32 %v1178, %v1329
  %v1331 = vpop.f32.mrb[0].mxu0
  %1332 = vmatprep.mubr.bf16.mxu0 %v683
  %1333 = vmatmul.mubr.bf16.gmra.mrb[0].mxu0 %v682
  %v1334 = vpop.f32.mrb[0].mxu0
  %v1335 = vadd.f32 %v1183, %v1334
  %v1336 = vpop.f32.mrb[0].mxu0
  %v1337 = vpop.f32.mrb[0].mxu0
  %v1338 = vpop.f32.mrb[0].mxu0
  %1339 = vdwg.mxu0
  %1340 = vmatprep.subr.bf16.mxu0 0
  %1341 = vmatpush1.bf16.msra.mxu0 %v835
  %1342 = vmatprep.subr.bf16.mxu0 0
  %1343 = vmatpush1.bf16.msra.mxu0 %v836
  %1344 = vmatprep.subr.bf16.mxu0 0
  %1345 = vmatpush1.bf16.msra.mxu0 %v837
  %1346 = vmatprep.subr.bf16.mxu0 0
  %1347 = vmatpush1.bf16.msra.mxu0 0
  %1348 = vmatprep.subr.bf16.mxu0 0
  %1349 = vmatpush1.bf16.msra.mxu0 0
  %1350 = vmatprep.subr.bf16.mxu0 0
  %1351 = vmatpush1.bf16.msra.mxu0 0
  %1352 = vmatprep.subr.bf16.mxu0 0
  %1353 = vmatpush1.bf16.msra.mxu0 0
  %1354 = vmatprep.subr.bf16.mxu0 0
  %1355 = vmatpush1.bf16.msra.mxu0 0
  %1356 = vmatprep.subr.bf16.mxu0 0
  %1357 = vmatpush1.bf16.msra.mxu0 0
  %1358 = vmatprep.subr.bf16.mxu0 0
  %1359 = vmatpush1.bf16.msra.mxu0 0
  %1360 = vmatprep.subr.bf16.mxu0 0
  %1361 = vmatpush1.bf16.msra.mxu0 0
  %1362 = vmatprep.subr.bf16.mxu0 0
  %1363 = vmatpush1.bf16.msra.mxu0 0
  %1364 = vmatprep.subr.bf16.mxu0 0
  %1365 = vmatpush1.bf16.msra.mxu0 0
  %1366 = vmatprep.subr.bf16.mxu0 0
  %1367 = vmatpush1.bf16.msra.mxu0 0
  %1368 = vmatprep.subr.bf16.mxu0 0
  %1369 = vmatpush1.bf16.msra.mxu0 0
  %1370 = vmatprep.subr.bf16.mxu0 0
  %1371 = vmatpush1.bf16.msra.mxu0 0
  %1372 = vmatprep.mubr.bf16.mxu0 0
  %1373 = vmatmul.mubr.bf16.gmra.mrb[0].mxu0 %v840
  %v1374 = vpop.f32.mrb[0].mxu0
  %v1375 = vadd.f32 %v1223, %v1374
  %v1376 = vpop.f32.mrb[0].mxu0
  %v1377 = vpop.f32.mrb[0].mxu0
  %v1378 = vadd.f32 %v1226, %v1377
  %v1379 = vpop.f32.mrb[0].mxu0
  %1380 = vmatprep.mubr.bf16.mxu0 0
  %1381 = vmatmul.mubr.bf16.gmra.mrb[0].mxu0 %v843
  %v1382 = vpop.f32.mrb[0].mxu0
  %v1383 = vadd.f32 %v1231, %v1382
  %v1384 = vpop.f32.mrb[0].mxu0
  %v1385 = vpop.f32.mrb[0].mxu0
  %v1386 = vadd.f32 %v1234, %v1385
  %v1387 = vpop.f32.mrb[0].mxu0
  %1388 = vmatprep.mubr.bf16.mxu0 0
  %1389 = vmatmul.mubr.bf16.gmra.mrb[0].mxu0 %v846
  %v1390 = vpop.f32.mrb[0].mxu0
  %v1391 = vadd.f32 %v1239, %v1390
  %v1392 = vpop.f32.mrb[0].mxu0
  %v1393 = vpop.f32.mrb[0].mxu0
  %v1394 = vadd.f32 %v1242, %v1393
  %v1395 = vpop.f32.mrb[0].mxu0
  %1396 = vmatprep.mubr.bf16.mxu0 0
  %1397 = vmatmul.mubr.bf16.gmra.mrb[0].mxu0 %v849
  %v1398 = vpop.f32.mrb[0].mxu0
  %v1399 = vadd.f32 %v1247, %v1398
  %v1400 = vpop.f32.mrb[0].mxu0
  %v1401 = vpop.f32.mrb[0].mxu0
  %v1402 = vadd.f32 %v1250, %v1401
  %v1403 = vpop.f32.mrb[0].mxu0
  %1404 = vmatprep.mubr.bf16.mxu0 0
  %1405 = vmatmul.mubr.bf16.gmra.mrb[0].mxu0 %v852
  %v1406 = vpop.f32.mrb[0].mxu0
  %v1407 = vadd.f32 %v1255, %v1406
  %v1408 = vpop.f32.mrb[0].mxu0
  %v1409 = vpop.f32.mrb[0].mxu0
  %v1410 = vadd.f32 %v1258, %v1409
  %v1411 = vpop.f32.mrb[0].mxu0
  %1412 = vmatprep.mubr.bf16.mxu0 0
  %1413 = vmatmul.mubr.bf16.gmra.mrb[0].mxu0 %v855
  %v1414 = vpop.f32.mrb[0].mxu0
  %v1415 = vadd.f32 %v1263, %v1414
  %v1416 = vpop.f32.mrb[0].mxu0
  %v1417 = vpop.f32.mrb[0].mxu0
  %v1418 = vadd.f32 %v1266, %v1417
  %v1419 = vpop.f32.mrb[0].mxu0
  %1420 = vmatprep.mubr.bf16.mxu0 0
  %1421 = vmatmul.mubr.bf16.gmra.mrb[0].mxu0 %v858
  %v1422 = vpop.f32.mrb[0].mxu0
  %v1423 = vadd.f32 %v1271, %v1422
  %v1424 = vpop.f32.mrb[0].mxu0
  %v1425 = vpop.f32.mrb[0].mxu0
  %v1426 = vadd.f32 %v1274, %v1425
  %v1427 = vpop.f32.mrb[0].mxu0
  %1428 = vmatprep.mubr.bf16.mxu0 0
  %1429 = vmatmul.mubr.bf16.gmra.mrb[0].mxu0 %v861
  %v1430 = vpop.f32.mrb[0].mxu0
  %v1431 = vadd.f32 %v1279, %v1430
  %v1432 = vpop.f32.mrb[0].mxu0
  %v1433 = vpop.f32.mrb[0].mxu0
  %v1434 = vadd.f32 %v1282, %v1433
  %v1435 = vpop.f32.mrb[0].mxu0
  %1436 = vmatprep.mubr.bf16.mxu0 0
  %1437 = vmatmul.mubr.bf16.gmra.mrb[0].mxu0 %v864
  %v1438 = vpop.f32.mrb[0].mxu0
  %v1439 = vadd.f32 %v1287, %v1438
  %v1440 = vpop.f32.mrb[0].mxu0
  %v1441 = vpop.f32.mrb[0].mxu0
  %v1442 = vadd.f32 %v1290, %v1441
  %v1443 = vpop.f32.mrb[0].mxu0
  %1444 = vmatprep.mubr.bf16.mxu0 0
  %1445 = vmatmul.mubr.bf16.gmra.mrb[0].mxu0 %v867
  %v1446 = vpop.f32.mrb[0].mxu0
  %v1447 = vadd.f32 %v1295, %v1446
  %v1448 = vpop.f32.mrb[0].mxu0
  %v1449 = vpop.f32.mrb[0].mxu0
  %v1450 = vadd.f32 %v1298, %v1449
  %v1451 = vpop.f32.mrb[0].mxu0
  %1452 = vmatprep.mubr.bf16.mxu0 0
  %1453 = vmatmul.mubr.bf16.gmra.mrb[0].mxu0 %v870
  %v1454 = vpop.f32.mrb[0].mxu0
  %v1455 = vadd.f32 %v1303, %v1454
  %v1456 = vpop.f32.mrb[0].mxu0
  %v1457 = vpop.f32.mrb[0].mxu0
  %v1458 = vadd.f32 %v1306, %v1457
  %v1459 = vpop.f32.mrb[0].mxu0
  %1460 = vmatprep.mubr.bf16.mxu0 0
  %1461 = vmatmul.mubr.bf16.gmra.mrb[0].mxu0 %v873
  %v1462 = vpop.f32.mrb[0].mxu0
  %v1463 = vadd.f32 %v1311, %v1462
  %v1464 = vpop.f32.mrb[0].mxu0
  %v1465 = vpop.f32.mrb[0].mxu0
  %v1466 = vadd.f32 %v1314, %v1465
  %v1467 = vpop.f32.mrb[0].mxu0
  %1468 = vmatprep.mubr.bf16.mxu0 0
  %1469 = vmatmul.mubr.bf16.gmra.mrb[0].mxu0 %v876
  %v1470 = vpop.f32.mrb[0].mxu0
  %v1471 = vadd.f32 %v1319, %v1470
  %v1472 = vpop.f32.mrb[0].mxu0
  %v1473 = vpop.f32.mrb[0].mxu0
  %v1474 = vadd.f32 %v1322, %v1473
  %v1475 = vpop.f32.mrb[0].mxu0
  %1476 = vmatprep.mubr.bf16.mxu0 0
  %1477 = vmatmul.mubr.bf16.gmra.mrb[0].mxu0 %v879
  %v1478 = vpop.f32.mrb[0].mxu0
  %v1479 = vadd.f32 %v1327, %v1478
  %v1480 = vpop.f32.mrb[0].mxu0
  %v1481 = vpop.f32.mrb[0].mxu0
  %v1482 = vadd.f32 %v1330, %v1481
  %v1483 = vpop.f32.mrb[0].mxu0
  %1484 = vmatprep.mubr.bf16.mxu0 0
  %1485 = vmatmul.mubr.bf16.gmra.mrb[0].mxu0 %v882
  %v1486 = vpop.f32.mrb[0].mxu0
  %v1487 = vadd.f32 %v1335, %v1486
  %v1488 = vpop.f32.mrb[0].mxu0
  %v1489 = vpop.f32.mrb[0].mxu0
  %v1490 = vpop.f32.mrb[0].mxu0
  %1491 = vdwg.mxu0
  %vm1492 = vcmask 400384
  %1493 = vst.msk [vmem:[%s3] sm:$0xff] %vm1492, %v1375
  %1494 = vst.msk [vmem:[%s3 + $0x8] sm:$0xff] %vm1492, %v1378
  %1495 = vst.msk [vmem:[%s3 + $0x10] sm:$0xff] %vm1492, %v1383
  %1496 = vst.msk [vmem:[%s3 + $0x18] sm:$0xff] %vm1492, %v1386
  %1497 = vst.msk [vmem:[%s3 + $0x20] sm:$0xff] %vm1492, %v1391
  %1498 = vst.msk [vmem:[%s3 + $0x28] sm:$0xff] %vm1492, %v1394
  %1499 = vst.msk [vmem:[%s3 + $0x30] sm:$0xff] %vm1492, %v1399
  %1500 = vst.msk [vmem:[%s3 + $0x38] sm:$0xff] %vm1492, %v1402
  %1501 = vst.msk [vmem:[%s3 + $0x40] sm:$0xff] %vm1492, %v1407
  %1502 = vst.msk [vmem:[%s3 + $0x48] sm:$0xff] %vm1492, %v1410
  %1503 = vst.msk [vmem:[%s3 + $0x50] sm:$0xff] %vm1492, %v1415
  %1504 = vst.msk [vmem:[%s3 + $0x58] sm:$0xff] %vm1492, %v1418
  %1505 = vst.msk [vmem:[%s3 + $0x60] sm:$0xff] %vm1492, %v1423
  %1506 = vst.msk [vmem:[%s3 + $0x68] sm:$0xff] %vm1492, %v1426
  %1507 = vst.msk [vmem:[%s3 + $0x70] sm:$0xff] %vm1492, %v1431
  %1508 = vst.msk [vmem:[%s3 + $0x78] sm:$0xff] %vm1492, %v1434
  %1509 = vst.msk [vmem:[%s3 + $0x80] sm:$0xff] %vm1492, %v1439
  %1510 = vst.msk [vmem:[%s3 + $0x88] sm:$0xff] %vm1492, %v1442
  %1511 = vst.msk [vmem:[%s3 + $0x90] sm:$0xff] %vm1492, %v1447
  %1512 = vst.msk [vmem:[%s3 + $0x98] sm:$0xff] %vm1492, %v1450
  %1513 = vst.msk [vmem:[%s3 + $0xa0] sm:$0xff] %vm1492, %v1455
  %1514 = vst.msk [vmem:[%s3 + $0xa8] sm:$0xff] %vm1492, %v1458
  %1515 = vst.msk [vmem:[%s3 + $0xb0] sm:$0xff] %vm1492, %v1463
  %1516 = vst.msk [vmem:[%s3 + $0xb8] sm:$0xff] %vm1492, %v1466
  %1517 = vst.msk [vmem:[%s3 + $0xc0] sm:$0xff] %vm1492, %v1471
  %1518 = vst.msk [vmem:[%s3 + $0xc8] sm:$0xff] %vm1492, %v1474
  %1519 = vst.msk [vmem:[%s3 + $0xd0] sm:$0xff] %vm1492, %v1479
  %1520 = vst.msk [vmem:[%s3 + $0xd8] sm:$0xff] %vm1492, %v1482
  %1521 = vst.msk [vmem:[%s3 + $0xe0] sm:$0xff] %vm1492, %v1487
  // Predicated region
  $region14: #{sigmoid_mul_conv1x1.1} parent=0 // pred_check
    _
  $region15: #{sigmoid_mul_conv1x1.1} parent=0 // pred_check_branch
    %1523 = sbr.rel (0) target = $region17
  $region16: #{sigmoid_mul_conv1x1.1} parent=0 // pred_region
    _
  $region17: #{sigmoid_mul_conv1x1.1} parent=0 // pred_fallthru
    _
  // Predicated region
  $region18: #{sigmoid_mul_conv1x1.1} parent=0 // pred_check
    _
  $region19: #{sigmoid_mul_conv1x1.1} parent=0 // pred_check_branch
    %1525 = sbr.rel (0) target = $region21
  $region20: #{sigmoid_mul_conv1x1.1} parent=0 // pred_region
    _
  $region21: #{sigmoid_mul_conv1x1.1} parent=0 // pred_fallthru
    _

</llo_original>
